<compile_context>
chip_gen: v7x
topology: tpu7x:2x2x1
jax: 0.10.0
libtpu: 0.0.40
codegen_flags: <defaults>
</compile_context>

<pallas_src>
import functools

import jax
import jax.numpy as jnp
from jax.experimental import pallas as pl
from jax.experimental.pallas import tpu as pltpu

_LANES = 128
_MIN_PALLAS_BYTES = 1 << 20        # below this, let XLA fuse (no kernel)
_MIN_TWO_STEP_BYTES = 512 * 1024   # above this, force >=2 grid steps (v7x)


def _lambda_kernel(x_ref, o_ref, *, func):
    # Apply the user-supplied (traceable, elementwise/shape-preserving)
    # function to the whole VMEM tile.
    o_ref[...] = func(x_ref[...]).astype(o_ref.dtype)


def _min_sublanes(dtype):
    # Sub-32-bit dtypes pack along sublanes: 8 rows for 32-bit, 16 for 16-bit,
    # 32 for 8-bit.
    return max(8, 32 // jnp.dtype(dtype).itemsize)


def _target_block_bytes():
    """Generation-aware block-size target.

    v6e / v7x default scoped VMEM is 32 MiB -> 4 MiB blocks (x 2 in + 2 out
    double buffers = 16 MiB) still leave headroom.  v5e default scoped VMEM is
    only 16 MiB, and 2 MiB blocks already sit at >=85% of its HBM roofline,
    so stay at 2 MiB there (and on unknown chips).
    """
    try:
        kind = jax.devices()[0].device_kind.lower()
    except Exception:  # pragma: no cover - defensive
        return 2 * 1024 * 1024
    if ("v6" in kind) or ("v7" in kind) or ("7x" in kind):
        return 4 * 1024 * 1024
    return 2 * 1024 * 1024


def _apply_elementwise_in_pallas(func, x, min_pallas_bytes=_MIN_PALLAS_BYTES):
    """Run an elementwise `func` over `x`, streaming through a Pallas kernel."""
    orig_shape = x.shape
    total = x.size
    in_item = jnp.dtype(x.dtype).itemsize

    # Small tensors: a standalone elementwise kernel can never beat XLA fusion
    # (it forces an extra HBM read+write) and fixed pallas_call overhead
    # dominates -> just apply the function directly.
    if total == 0 or total * in_item < min_pallas_bytes:
        return func(x)

    # Output dtype follows func (supports dtype-changing elementwise lambdas).
    # Contract: func is elementwise, shape-preserving, shape-independent dtype.
    out_dtype = jax.eval_shape(
        func, jax.ShapeDtypeStruct((8, _LANES), x.dtype)).dtype
    out_item = jnp.dtype(out_dtype).itemsize
    min_rows = max(_min_sublanes(x.dtype), _min_sublanes(out_dtype))

    x_flat = jnp.ravel(x)  # contiguous -> metadata-only reshape

    # 128-aligned main slab through Pallas; the <128-element remainder (if
    # any) is computed in plain JAX.  No jnp.pad / full-tensor slice passes.
    main = (total // _LANES) * _LANES
    if main == 0:
        return func(x)

    # Widest lane-dense column count (multiple of 128) dividing the main slab:
    # wide unmasked stores and fewer grid steps.
    cols = _LANES
    for cand in (2048, 1024, 512, 256, _LANES):
        if main % cand == 0:
            cols = cand
            break
    rows = main // cols

    x_main = x_flat if main == total else x_flat[:main]
    x2d = x_main.reshape(rows, cols)

    # Row-tile sized toward the generation-aware block target, rounded to the
    # dtype-aware sublane multiple, clamped to the slab extent.
    bytes_per_row = cols * max(in_item, out_item)
    target = _target_block_bytes()
    tile_rows = max(min_rows,
                    (target // bytes_per_row) // min_rows * min_rows)
    tile_rows = min(tile_rows, rows)

    # v7x: keep >=2 grid steps for mid-size slabs so both TensorCores stream
    # the ("parallel",) grid axis.  Neutral on single-TC v5e/v6e.
    slab_bytes = rows * bytes_per_row
    if slab_bytes >= _MIN_TWO_STEP_BYTES and rows >= 2 * min_rows:
        half = (rows // 2) // min_rows * min_rows
        tile_rows = min(tile_rows, max(half, min_rows))

    grid = (pl.cdiv(rows, tile_rows),)

    # Advisory cost hint so XLA can overlap neighbouring HLOs with this call.
    cost = pl.CostEstimate(
        flops=2 * main,
        transcendentals=main,
        bytes_accessed=main * (in_item + out_item),
    )

    out2d = pl.pallas_call(
        functools.partial(_lambda_kernel, func=func),
        out_shape=jax.ShapeDtypeStruct((rows, cols), out_dtype),
        grid_spec=pltpu.PrefetchScalarGridSpec(
            num_scalar_prefetch=0,
            grid=grid,
            in_specs=[pl.BlockSpec((tile_rows, cols), lambda i: (i, 0))],
            out_specs=pl.BlockSpec((tile_rows, cols), lambda i: (i, 0)),
        ),
        compiler_params=pltpu.CompilerParams(
            dimension_semantics=("parallel",)),
        cost_estimate=cost,
    )(x2d)

    out_flat = out2d.reshape(-1)
    if main != total:
        # <128-element ragged tail: plain JAX (tiny, fused by XLA).
        tail = func(x_flat[main:]).astype(out_dtype)
        out_flat = jnp.concatenate([out_flat, tail])
    return out_flat.reshape(orig_shape)


class PallasLambda:
    """JAX/Pallas equivalent of:

        class Lambda(nn.Module):
            def __init__(self, func): ...
            def forward(self, x): return self.func(x)

    Elementwise / shape-preserving funcs run inside a Pallas kernel (for
    inputs big enough that a standalone kernel makes sense).  Shape-changing
    funcs (e.g. `lambda x: x.view(x.size(0), -1)`) are pure metadata ops and
    are applied directly in JAX — no extra HBM pass.
    """

    def __init__(self, func, elementwise=True,
                 min_pallas_bytes=_MIN_PALLAS_BYTES):
        self.func = func
        self.elementwise = elementwise
        self.min_pallas_bytes = min_pallas_bytes

    def __call__(self, x):
        if self.elementwise:
            return _apply_elementwise_in_pallas(
                self.func, x, min_pallas_bytes=self.min_pallas_bytes)
        # Reshape/view-style lambdas: metadata only, zero compute -> no kernel.
        return self.func(x)


if __name__ == "__main__":
    key = jax.random.PRNGKey(0)

    # ---- 1. Elementwise lambda on a >1 MiB tensor: real Pallas path, with a
    #         >=2-step parallel grid (so v7x shards across both TCs).
    x_big = jax.random.normal(key, (2, 4, 256, 256), dtype=jnp.float32)  # 2 MiB
    lam_elem = PallasLambda(lambda t: jax.nn.sigmoid(t) * 2.0 - 1.0,
                            elementwise=True)
    y_big = jax.block_until_ready(lam_elem(x_big))
    y_big_ref = jax.nn.sigmoid(x_big) * 2.0 - 1.0
    assert y_big.shape == x_big.shape and y_big.dtype == x_big.dtype
    assert jnp.allclose(y_big, y_big_ref, atol=1e-6)

    # ---- 2. Small NCHW input (spec shape 2x4x16x16): short-circuits to plain
    #         func(x) so XLA can fuse it (no standalone kernel overhead).
    x = jax.random.normal(key, (2, 4, 16, 16), dtype=jnp.float32)
    y_small = jax.block_until_ready(lam_elem(x))
    assert jnp.allclose(y_small, jax.nn.sigmoid(x) * 2.0 - 1.0, atol=1e-6)

    # ---- 3. bf16 input, kernel path forced (min_pallas_bytes=0) to exercise
    #         the dtype-aware sublane sizing (16-row packing for bf16).
    xb = jax.random.normal(key, (2, 4, 64, 64), dtype=jnp.bfloat16)
    lam_tanh = PallasLambda(jnp.tanh, elementwise=True, min_pallas_bytes=0)
    y_b = jax.block_until_ready(lam_tanh(xb))
    assert y_b.shape == xb.shape and y_b.dtype == jnp.bfloat16
    assert jnp.allclose(y_b.astype(jnp.float32),
                        jnp.tanh(xb).astype(jnp.float32), atol=1e-2)

    # ---- 4. Ragged size (not a multiple of 128), kernel path forced: the
    #         128-aligned main slab goes through Pallas, the 37-element tail
    #         runs in plain JAX (no pad / full-tensor slice).
    xr = jax.random.normal(key, (5, 417), dtype=jnp.float32)  # 2085 elements
    lam_affine = PallasLambda(lambda t: t * 3.0 + 1.0, elementwise=True,
                              min_pallas_bytes=0)
    y_r = jax.block_until_ready(lam_affine(xr))
    assert y_r.shape == xr.shape
    assert jnp.allclose(y_r, xr * 3.0 + 1.0, atol=1e-6)

    # ---- 5. Flatten lambda `x.view(x.size(0), -1)` as used in vae_dronet:
    #         metadata-only reshape, applied directly (no kernel pass needed).
    lam_flat = PallasLambda(lambda t: t.reshape(t.shape[0], -1),
                            elementwise=False)
    y_flat = jax.block_until_ready(lam_flat(x))
    assert y_flat.shape == (2, 4 * 16 * 16)
    assert jnp.allclose(y_flat, x.reshape(2, -1), atol=0.0)

    print("KERNEL_OK")
</pallas_src>

<mosaic_0001>
module attributes {stable_mosaic.version = 11 : i64} {
  func.func @_lambda_kernel(%arg0: i32, %arg1: memref<128x2048xf32, #tpu.memory_space<vmem>>, %arg2: memref<128x2048xf32, #tpu.memory_space<vmem>>) attributes {dimension_semantics = [#tpu.dimension_semantics<parallel>], iteration_bounds = array<i64: 2>, scalar_prefetch = 0 : i64, scratch_operands = 0 : i64, tpu.core_type = #tpu.core_type<tc>, window_params = [{transform_indices = @transform_0, window_bounds = array<i64: 128, 2048>}, {transform_indices = @transform_1, window_bounds = array<i64: 128, 2048>}]} {
    %c0 = arith.constant 0 : index
    %c0_0 = arith.constant 0 : index
    %0 = vector.load %arg1[%c0, %c0_0] : memref<128x2048xf32, #tpu.memory_space<vmem>>, vector<128x2048xf32>
    %1 = arith.negf %0 : vector<128x2048xf32>
    %2 = math.exp %1 : vector<128x2048xf32>
    %cst = arith.constant 1.000000e+00 : f32
    %3 = vector.broadcast %cst : f32 to vector<128x2048xf32>
    %4 = arith.addf %3, %2 : vector<128x2048xf32>
    %5 = arith.divf %3, %4 : vector<128x2048xf32>
    %cst_1 = arith.constant 2.000000e+00 : f32
    %6 = vector.broadcast %cst_1 : f32 to vector<128x2048xf32>
    %7 = arith.mulf %5, %6 : vector<128x2048xf32>
    %cst_2 = arith.constant 1.000000e+00 : f32
    %8 = vector.broadcast %cst_2 : f32 to vector<128x2048xf32>
    %9 = arith.subf %7, %8 : vector<128x2048xf32>
    %c0_3 = arith.constant 0 : index
    %c0_4 = arith.constant 0 : index
    %10 = vector.load %arg2[%c0_3, %c0_4] : memref<128x2048xf32, #tpu.memory_space<vmem>>, vector<128x2048xf32>
    tpu.vector_store %arg2[%c0_3, %c0_4], %9 {strides = array<i32>} : memref<128x2048xf32, #tpu.memory_space<vmem>>, vector<128x2048xf32>,
    return
  }
  func.func @transform_0(%arg0: i32) -> (i32, i32) {
    %c0_i32 = arith.constant 0 : i32
    %c0_i32_0 = arith.constant 0 : i32
    return %arg0, %c0_i32 : i32, i32
  }
  func.func @transform_1(%arg0: i32) -> (i32, i32) {
    %c0_i32 = arith.constant 0 : i32
    %c0_i32_0 = arith.constant 0 : i32
    return %arg0, %c0_i32 : i32, i32
  }
}

</mosaic_0001>

<llo_original>
// kernel: tpu_custom_call.1
$region0: #{tpu_custom_call.1}
  #allocation0 [shape = 'u32[]', space=smem, size = 0x4, offset = 0x4, fixed_abs, tag = 'smem constant byte address 0x4 - core index']
  #allocation1 [shape = 'u32[144,128]{1,0:T(1,128)}', space=vmem, size = 0x12000, scoped, tag = 'internal scratch']
  %s0 = inlined_call_operand.hbm [shape: f32[256,2048], index: 0, kind: input, shape index: {}]
  %s1 = inlined_call_operand.hbm [shape: f32[256,2048], index: 1, kind: output, shape index: {}]
  %s2 = sld [smem:[#allocation0]]
  $region41: #{tpu_custom_call.1} parent=0
    _
  %s4 = ssub.s32 1, %s2
  %s5 = scalar_select 0, %s4, %s2
  $region1: #{tpu_custom_call.1} parent=0
    #allocation2 [shape = 'u8[2097152]{0}', space=vmem, size = 0x200000, scoped, tag = 'input window, operand 0']
    #allocation3 [shape = 's32[2]{0}', space=sflag, size = 0x8, scoped, tag = 'scoped memory for tpu_custom_call.1']
    #allocation4 [shape = 's32[2]{0}', space=sflag, size = 0x8, scoped, tag = 'scoped memory for tpu_custom_call.1']
    #allocation5 [shape = 'u8[2097152]{0}', space=vmem, size = 0x200000, scoped, tag = 'output window, operand 0']
    %6 = vsyncpa [#allocation3], 0
    %s7 = scalar_lea.sflag [#allocation3], 1
    %8 = vsyncpa %s7, 0
    %9 = vsyncpa [#allocation4], 0
    %s10 = scalar_lea.sflag [#allocation4], 1
    %11 = vsyncpa %s10, 0
    loop: start=0, step=1, limit=4
    $region2: #{tpu_custom_call.1} parent=1 // loop_pre_header
      _
    $region3: #{tpu_custom_call.1} parent=1 // loop_header
      %s13 = sphi 0, %s17
      %p14 = scmp.ge.s32.totalorder %s13, 4
      %s23 = sphi 0, %s25
      %s26 = sphi 0, %s23
      %s27 = sphi 0, %s26
      %s43 = sphi 0, %s27
      %s49 = sphi 0, %s51
      %s52 = sphi 0, %s49
      %s53 = sphi 0, %s52
      %s69 = sphi 0, %s53
    $region4: #{tpu_custom_call.1} parent=1 // loop_header_branch
      %16 = sbr.rel (%p14) target = $region8
    $region5: #{tpu_custom_call.1} parent=1 // loop_body
      %s18 = ssub.s32 %s13, 1
      %s19 = ssub.s32 %s13, 2
      %s20 = sadd.s32 %s13, 1
      %s21 = ssub.s32 %s13, %s20
      %p22 = scmp.eq.s32.totalorder %s21, 0
      %s24 = sadd.s32 %s23, 1
      %s25 = scalar_select %p22, %s23, %s24
      %p28 = pneg %p22
      %p29 = scmp.eq.s32.totalorder %s13, 1
      %p30 = por %p28, %p29
      %p31 = scmp.ne.s32.totalorder %s23, %s26
      %p32 = scmp.eq.s32.totalorder %s13, 0
      %p33 = por %p31, %p32
      %p34 = scmp.ne.s32.totalorder %s23, %s26
      %p35 = scmp.eq.s32.totalorder %s18, 1
      %p36 = por %p34, %p35
      %p37 = scmp.ne.s32.totalorder %s26, %s27
      %p38 = scmp.eq.s32.totalorder %s18, 0
      %p39 = por %p37, %p38
      %p40 = scmp.ne.s32.totalorder %s26, %s27
      %p41 = scmp.eq.s32.totalorder %s19, 1
      %p42 = por %p40, %p41
      %p44 = scmp.ne.s32.totalorder %s27, %s43
      %p45 = scmp.eq.s32.totalorder %s19, 0
      %p46 = por %p44, %p45
      %s47 = ssub.s32 %s13, %s20
      %p48 = scmp.eq.s32.totalorder %s47, 0
      %s50 = sadd.s32 %s49, 1
      %s51 = scalar_select %p48, %s49, %s50
      %p54 = pneg %p48
      %p55 = scmp.eq.s32.totalorder %s13, 1
      %p56 = por %p54, %p55
      %p57 = scmp.ne.s32.totalorder %s49, %s52
      %p58 = scmp.eq.s32.totalorder %s13, 0
      %p59 = por %p57, %p58
      %p60 = scmp.ne.s32.totalorder %s49, %s52
      %p61 = scmp.eq.s32.totalorder %s18, 1
      %p62 = por %p60, %p61
      %p63 = scmp.ne.s32.totalorder %s52, %s53
      %p64 = scmp.eq.s32.totalorder %s18, 0
      %p65 = por %p63, %p64
      %p66 = scmp.ne.s32.totalorder %s52, %s53
      %p67 = scmp.eq.s32.totalorder %s19, 1
      %p68 = por %p66, %p67
      %p70 = scmp.ne.s32.totalorder %s53, %s69
      %p71 = scmp.eq.s32.totalorder %s19, 0
      %p72 = por %p70, %p71
      %p73 = scmp.le.s32.totalorder 1, %s13
      %p74 = scmp.lt.s32.totalorder %s13, 3
      %p75 = pnand %p73, %p74
      %p76 = pneg %p75
      // Predicated region
      $region9: #{tpu_custom_call.1} parent=5 // pred_check
        _
      $region10: #{tpu_custom_call.1} parent=5 // pred_check_branch
        %78 = sbr.rel (%p75) target = $region12
      $region11: #{tpu_custom_call.1} parent=5 // pred_region
        %s79 = ssub.s32 %s13, 1
      $region12: #{tpu_custom_call.1} parent=5 // pred_fallthru
        _
      %p80 = scmp.lt.s32.totalorder %s13, 2
      // Predicated region
      $region13: #{tpu_custom_call.1} parent=5 // pred_check
        %p81 = pneg %p80
      $region14: #{tpu_custom_call.1} parent=5 // pred_check_branch
        %83 = sbr.rel (%p81) target = $region16
      $region15: #{tpu_custom_call.1} parent=5 // pred_region
        // Predicated region
        $region17: #{tpu_custom_call.1} parent=15 // pred_check
          %p84 = pneg %p33
        $region18: #{tpu_custom_call.1} parent=15 // pred_check_branch
          %86 = sbr.rel (%p84) target = $region20
        $region19: #{tpu_custom_call.1} parent=15 // pred_region
          %s87 = sand.u32 %s23, 1
          %s88 = scalar_lea.sflag [#allocation3], %s87
          %s89 = sand.u32 %s23, 1
          %s90 = smul.addr %s89, 2048
          %s91 = scalar_lea.vmem [#allocation2], %s90
          %s92 = smul.u32 16, %s13
          %s94 = ssub.s32 32768, 32768
          %95 = vsyncadd %s88, %s94
          %s96 = smul.addr %s92, 16
          %s97 = smul.addr %s96, 128
          %s98 = scalar_lea.hbm %s0, %s97
          %s99 = sshll.u32 %s91, 4
          %s100 = int_to_ptr.vmem [resolvable:$true] %s99
          %105 = dma.hbm_to_vmem [thread:$0]  %s98, 32768, %s100, %s88, 2048, 2048, 128
        $region20: #{tpu_custom_call.1} parent=15 // pred_fallthru
          _
      $region16: #{tpu_custom_call.1} parent=5 // pred_fallthru
        _
      %p106 = scmp.le.s32.totalorder 1, %s13
      %p107 = scmp.lt.s32.totalorder %s13, 3
      %p108 = pnand %p106, %p107
      %p109 = pneg %p108
      // Predicated region
      $region21: #{tpu_custom_call.1} parent=5 // pred_check
        _
      $region22: #{tpu_custom_call.1} parent=5 // pred_check_branch
        %111 = sbr.rel (%p108) target = $region24
      $region23: #{tpu_custom_call.1} parent=5 // pred_region
        %s112 = ssub.s32 %s13, 1
        %s113 = sand.u32 %s26, 1
        %s114 = scalar_lea.sflag [#allocation3], %s113
        %s115 = sand.u32 %s26, 1
        %s116 = smul.addr %s115, 2048
        %s117 = scalar_lea.vmem [#allocation2], %s116
        // Predicated region
        $region25: #{tpu_custom_call.1} parent=23 // pred_check
          %p118 = pneg %p39
        $region26: #{tpu_custom_call.1} parent=23 // pred_check_branch
          %120 = sbr.rel (%p118) target = $region28
        $region27: #{tpu_custom_call.1} parent=23 // pred_region
          %121 = dma.done %s114, 32768
        $region28: #{tpu_custom_call.1} parent=23 // pred_fallthru
          _
        %s122 = sand.u32 %s26, 1
        %s123 = scalar_lea.sflag [#allocation3], %s122
        %s124 = sand.u32 %s26, 1
        %s125 = smul.addr %s124, 2048
        %s126 = scalar_lea.vmem [#allocation2], %s125
        %p127 = pneg %p39
        %p128 = pneg %p36
        %p129 = pneg %p65
        %p130 = pneg %p62
        %s131 = sand.u32 %s52, 1
        %s132 = scalar_lea.sflag [#allocation4], %s131
        %s133 = sand.u32 %s52, 1
        %s134 = smul.addr %s133, 2048
        %s135 = scalar_lea.vmem [#allocation5], %s134
        %s136 = smul.u32 16, %s18
        %s137 = smul.u32 16, %s18
        %v138 = vld [vmem:[%s117] sm:$0xff]
        %v139 = vld [vmem:[%s117 + $0x8] sm:$0xff]
        %v140 = vld [vmem:[%s117 + $0x10] sm:$0xff]
        %v141 = vld [vmem:[%s117 + $0x18] sm:$0xff]
        %v142 = vld [vmem:[%s117 + $0x20] sm:$0xff]
        %v143 = vld [vmem:[%s117 + $0x28] sm:$0xff]
        %v144 = vld [vmem:[%s117 + $0x30] sm:$0xff]
        %v145 = vld [vmem:[%s117 + $0x38] sm:$0xff]
        %v146 = vld [vmem:[%s117 + $0x40] sm:$0xff]
        %v147 = vld [vmem:[%s117 + $0x48] sm:$0xff]
        %v148 = vld [vmem:[%s117 + $0x50] sm:$0xff]
        %v149 = vld [vmem:[%s117 + $0x58] sm:$0xff]
        %v150 = vld [vmem:[%s117 + $0x60] sm:$0xff]
        %v151 = vld [vmem:[%s117 + $0x68] sm:$0xff]
        %v152 = vld [vmem:[%s117 + $0x70] sm:$0xff]
        %v153 = vld [vmem:[%s117 + $0x78] sm:$0xff]
        %v154 = vld [vmem:[%s117 + $0x80] sm:$0xff]
        %v155 = vld [vmem:[%s117 + $0x88] sm:$0xff]
        %v156 = vld [vmem:[%s117 + $0x90] sm:$0xff]
        %v157 = vld [vmem:[%s117 + $0x98] sm:$0xff]
        %v158 = vld [vmem:[%s117 + $0xa0] sm:$0xff]
        %v159 = vld [vmem:[%s117 + $0xa8] sm:$0xff]
        %v160 = vld [vmem:[%s117 + $0xb0] sm:$0xff]
        %v161 = vld [vmem:[%s117 + $0xb8] sm:$0xff]
        %v162 = vld [vmem:[%s117 + $0xc0] sm:$0xff]
        %v163 = vld [vmem:[%s117 + $0xc8] sm:$0xff]
        %v164 = vld [vmem:[%s117 + $0xd0] sm:$0xff]
        %v165 = vld [vmem:[%s117 + $0xd8] sm:$0xff]
        %v166 = vld [vmem:[%s117 + $0xe0] sm:$0xff]
        %v167 = vld [vmem:[%s117 + $0xe8] sm:$0xff]
        %v168 = vld [vmem:[%s117 + $0xf0] sm:$0xff]
        %v169 = vld [vmem:[%s117 + $0xf8] sm:$0xff]
        %v170 = vld [vmem:[%s117 + $0x100] sm:$0xff]
        %v171 = vld [vmem:[%s117 + $0x108] sm:$0xff]
        %v172 = vld [vmem:[%s117 + $0x110] sm:$0xff]
        %v173 = vld [vmem:[%s117 + $0x118] sm:$0xff]
        %v174 = vld [vmem:[%s117 + $0x120] sm:$0xff]
        %v175 = vld [vmem:[%s117 + $0x128] sm:$0xff]
        %v176 = vld [vmem:[%s117 + $0x130] sm:$0xff]
        %v177 = vld [vmem:[%s117 + $0x138] sm:$0xff]
        %v178 = vld [vmem:[%s117 + $0x140] sm:$0xff]
        %v179 = vld [vmem:[%s117 + $0x148] sm:$0xff]
        %v180 = vld [vmem:[%s117 + $0x150] sm:$0xff]
        %v181 = vld [vmem:[%s117 + $0x158] sm:$0xff]
        %v182 = vld [vmem:[%s117 + $0x160] sm:$0xff]
        %v183 = vld [vmem:[%s117 + $0x168] sm:$0xff]
        %v184 = vld [vmem:[%s117 + $0x170] sm:$0xff]
        %v185 = vld [vmem:[%s117 + $0x178] sm:$0xff]
        %v186 = vld [vmem:[%s117 + $0x180] sm:$0xff]
        %v187 = vld [vmem:[%s117 + $0x188] sm:$0xff]
        %v188 = vld [vmem:[%s117 + $0x190] sm:$0xff]
        %v189 = vld [vmem:[%s117 + $0x198] sm:$0xff]
        %v190 = vld [vmem:[%s117 + $0x1a0] sm:$0xff]
        %v191 = vld [vmem:[%s117 + $0x1a8] sm:$0xff]
        %v192 = vld [vmem:[%s117 + $0x1b0] sm:$0xff]
        %v193 = vld [vmem:[%s117 + $0x1b8] sm:$0xff]
        %v194 = vld [vmem:[%s117 + $0x1c0] sm:$0xff]
        %v195 = vld [vmem:[%s117 + $0x1c8] sm:$0xff]
        %v196 = vld [vmem:[%s117 + $0x1d0] sm:$0xff]
        %v197 = vld [vmem:[%s117 + $0x1d8] sm:$0xff]
        %v198 = vld [vmem:[%s117 + $0x1e0] sm:$0xff]
        %v199 = vld [vmem:[%s117 + $0x1e8] sm:$0xff]
        %v200 = vld [vmem:[%s117 + $0x1f0] sm:$0xff]
        %v201 = vld [vmem:[%s117 + $0x1f8] sm:$0xff]
        %v202 = vld [vmem:[%s117 + $0x200] sm:$0xff]
        %v203 = vld [vmem:[%s117 + $0x208] sm:$0xff]
        %v204 = vld [vmem:[%s117 + $0x210] sm:$0xff]
        %v205 = vld [vmem:[%s117 + $0x218] sm:$0xff]
        %v206 = vld [vmem:[%s117 + $0x220] sm:$0xff]
        %v207 = vld [vmem:[%s117 + $0x228] sm:$0xff]
        %v208 = vld [vmem:[%s117 + $0x230] sm:$0xff]
        %v209 = vld [vmem:[%s117 + $0x238] sm:$0xff]
        %v210 = vld [vmem:[%s117 + $0x240] sm:$0xff]
        %v211 = vld [vmem:[%s117 + $0x248] sm:$0xff]
        %v212 = vld [vmem:[%s117 + $0x250] sm:$0xff]
        %v213 = vld [vmem:[%s117 + $0x258] sm:$0xff]
        %v214 = vld [vmem:[%s117 + $0x260] sm:$0xff]
        %v215 = vld [vmem:[%s117 + $0x268] sm:$0xff]
        %v216 = vld [vmem:[%s117 + $0x270] sm:$0xff]
        %v217 = vld [vmem:[%s117 + $0x278] sm:$0xff]
        %v218 = vld [vmem:[%s117 + $0x280] sm:$0xff]
        %v219 = vld [vmem:[%s117 + $0x288] sm:$0xff]
        %v220 = vld [vmem:[%s117 + $0x290] sm:$0xff]
        %v221 = vld [vmem:[%s117 + $0x298] sm:$0xff]
        %v222 = vld [vmem:[%s117 + $0x2a0] sm:$0xff]
        %v223 = vld [vmem:[%s117 + $0x2a8] sm:$0xff]
        %v224 = vld [vmem:[%s117 + $0x2b0] sm:$0xff]
        %v225 = vld [vmem:[%s117 + $0x2b8] sm:$0xff]
        %v226 = vld [vmem:[%s117 + $0x2c0] sm:$0xff]
        %v227 = vld [vmem:[%s117 + $0x2c8] sm:$0xff]
        %v228 = vld [vmem:[%s117 + $0x2d0] sm:$0xff]
        %v229 = vld [vmem:[%s117 + $0x2d8] sm:$0xff]
        %v230 = vld [vmem:[%s117 + $0x2e0] sm:$0xff]
        %v231 = vld [vmem:[%s117 + $0x2e8] sm:$0xff]
        %v232 = vld [vmem:[%s117 + $0x2f0] sm:$0xff]
        %v233 = vld [vmem:[%s117 + $0x2f8] sm:$0xff]
        %v234 = vld [vmem:[%s117 + $0x300] sm:$0xff]
        %v235 = vld [vmem:[%s117 + $0x308] sm:$0xff]
        %v236 = vld [vmem:[%s117 + $0x310] sm:$0xff]
        %v237 = vld [vmem:[%s117 + $0x318] sm:$0xff]
        %v238 = vld [vmem:[%s117 + $0x320] sm:$0xff]
        %v239 = vld [vmem:[%s117 + $0x328] sm:$0xff]
        %v240 = vld [vmem:[%s117 + $0x330] sm:$0xff]
        %v241 = vld [vmem:[%s117 + $0x338] sm:$0xff]
        %v242 = vld [vmem:[%s117 + $0x340] sm:$0xff]
        %v243 = vld [vmem:[%s117 + $0x348] sm:$0xff]
        %v244 = vld [vmem:[%s117 + $0x350] sm:$0xff]
        %v245 = vld [vmem:[%s117 + $0x358] sm:$0xff]
        %v246 = vld [vmem:[%s117 + $0x360] sm:$0xff]
        %v247 = vld [vmem:[%s117 + $0x368] sm:$0xff]
        %v248 = vld [vmem:[%s117 + $0x370] sm:$0xff]
        %v249 = vld [vmem:[%s117 + $0x378] sm:$0xff]
        %v250 = vld [vmem:[%s117 + $0x380] sm:$0xff]
        %v251 = vld [vmem:[%s117 + $0x388] sm:$0xff]
        %v252 = vld [vmem:[%s117 + $0x390] sm:$0xff]
        %v253 = vld [vmem:[%s117 + $0x398] sm:$0xff]
        %v254 = vld [vmem:[%s117 + $0x3a0] sm:$0xff]
        %v255 = vld [vmem:[%s117 + $0x3a8] sm:$0xff]
        %v256 = vld [vmem:[%s117 + $0x3b0] sm:$0xff]
        %v257 = vld [vmem:[%s117 + $0x3b8] sm:$0xff]
        %v258 = vld [vmem:[%s117 + $0x3c0] sm:$0xff]
        %v259 = vld [vmem:[%s117 + $0x3c8] sm:$0xff]
        %v260 = vld [vmem:[%s117 + $0x3d0] sm:$0xff]
        %v261 = vld [vmem:[%s117 + $0x3d8] sm:$0xff]
        %v262 = vld [vmem:[%s117 + $0x3e0] sm:$0xff]
        %v263 = vld [vmem:[%s117 + $0x3e8] sm:$0xff]
        %v264 = vld [vmem:[%s117 + $0x3f0] sm:$0xff]
        %v265 = vld [vmem:[%s117 + $0x3f8] sm:$0xff]
        %v266 = vld [vmem:[%s117 + $0x400] sm:$0xff]
        %v267 = vld [vmem:[%s117 + $0x408] sm:$0xff]
        %v268 = vld [vmem:[%s117 + $0x410] sm:$0xff]
        %v269 = vld [vmem:[%s117 + $0x418] sm:$0xff]
        %v270 = vld [vmem:[%s117 + $0x420] sm:$0xff]
        %v271 = vld [vmem:[%s117 + $0x428] sm:$0xff]
        %v272 = vld [vmem:[%s117 + $0x430] sm:$0xff]
        %v273 = vld [vmem:[%s117 + $0x438] sm:$0xff]
        %v274 = vld [vmem:[%s117 + $0x440] sm:$0xff]
        %v275 = vld [vmem:[%s117 + $0x448] sm:$0xff]
        %v276 = vld [vmem:[%s117 + $0x450] sm:$0xff]
        %v277 = vld [vmem:[%s117 + $0x458] sm:$0xff]
        %v278 = vld [vmem:[%s117 + $0x460] sm:$0xff]
        %v279 = vld [vmem:[%s117 + $0x468] sm:$0xff]
        %v280 = vld [vmem:[%s117 + $0x470] sm:$0xff]
        %v281 = vld [vmem:[%s117 + $0x478] sm:$0xff]
        %v282 = vld [vmem:[%s117 + $0x480] sm:$0xff]
        %v283 = vld [vmem:[%s117 + $0x488] sm:$0xff]
        %v284 = vld [vmem:[%s117 + $0x490] sm:$0xff]
        %v285 = vld [vmem:[%s117 + $0x498] sm:$0xff]
        %v286 = vld [vmem:[%s117 + $0x4a0] sm:$0xff]
        %v287 = vld [vmem:[%s117 + $0x4a8] sm:$0xff]
        %v288 = vld [vmem:[%s117 + $0x4b0] sm:$0xff]
        %v289 = vld [vmem:[%s117 + $0x4b8] sm:$0xff]
        %v290 = vld [vmem:[%s117 + $0x4c0] sm:$0xff]
        %v291 = vld [vmem:[%s117 + $0x4c8] sm:$0xff]
        %v292 = vld [vmem:[%s117 + $0x4d0] sm:$0xff]
        %v293 = vld [vmem:[%s117 + $0x4d8] sm:$0xff]
        %v294 = vld [vmem:[%s117 + $0x4e0] sm:$0xff]
        %v295 = vld [vmem:[%s117 + $0x4e8] sm:$0xff]
        %v296 = vld [vmem:[%s117 + $0x4f0] sm:$0xff]
        %v297 = vld [vmem:[%s117 + $0x4f8] sm:$0xff]
        %v298 = vld [vmem:[%s117 + $0x500] sm:$0xff]
        %v299 = vld [vmem:[%s117 + $0x508] sm:$0xff]
        %v300 = vld [vmem:[%s117 + $0x510] sm:$0xff]
        %v301 = vld [vmem:[%s117 + $0x518] sm:$0xff]
        %v302 = vld [vmem:[%s117 + $0x520] sm:$0xff]
        %v303 = vld [vmem:[%s117 + $0x528] sm:$0xff]
        %v304 = vld [vmem:[%s117 + $0x530] sm:$0xff]
        %v305 = vld [vmem:[%s117 + $0x538] sm:$0xff]
        %v306 = vld [vmem:[%s117 + $0x540] sm:$0xff]
        %v307 = vld [vmem:[%s117 + $0x548] sm:$0xff]
        %v308 = vld [vmem:[%s117 + $0x550] sm:$0xff]
        %v309 = vld [vmem:[%s117 + $0x558] sm:$0xff]
        %v310 = vld [vmem:[%s117 + $0x560] sm:$0xff]
        %v311 = vld [vmem:[%s117 + $0x568] sm:$0xff]
        %v312 = vld [vmem:[%s117 + $0x570] sm:$0xff]
        %v313 = vld [vmem:[%s117 + $0x578] sm:$0xff]
        %v314 = vld [vmem:[%s117 + $0x580] sm:$0xff]
        %v315 = vld [vmem:[%s117 + $0x588] sm:$0xff]
        %v316 = vld [vmem:[%s117 + $0x590] sm:$0xff]
        %v317 = vld [vmem:[%s117 + $0x598] sm:$0xff]
        %v318 = vld [vmem:[%s117 + $0x5a0] sm:$0xff]
        %v319 = vld [vmem:[%s117 + $0x5a8] sm:$0xff]
        %v320 = vld [vmem:[%s117 + $0x5b0] sm:$0xff]
        %v321 = vld [vmem:[%s117 + $0x5b8] sm:$0xff]
        %v322 = vld [vmem:[%s117 + $0x5c0] sm:$0xff]
        %v323 = vld [vmem:[%s117 + $0x5c8] sm:$0xff]
        %v324 = vld [vmem:[%s117 + $0x5d0] sm:$0xff]
        %v325 = vld [vmem:[%s117 + $0x5d8] sm:$0xff]
        %v326 = vld [vmem:[%s117 + $0x5e0] sm:$0xff]
        %v327 = vld [vmem:[%s117 + $0x5e8] sm:$0xff]
        %v328 = vld [vmem:[%s117 + $0x5f0] sm:$0xff]
        %v329 = vld [vmem:[%s117 + $0x5f8] sm:$0xff]
        %v330 = vld [vmem:[%s117 + $0x600] sm:$0xff]
        %v331 = vld [vmem:[%s117 + $0x608] sm:$0xff]
        %v332 = vld [vmem:[%s117 + $0x610] sm:$0xff]
        %v333 = vld [vmem:[%s117 + $0x618] sm:$0xff]
        %v334 = vld [vmem:[%s117 + $0x620] sm:$0xff]
        %v335 = vld [vmem:[%s117 + $0x628] sm:$0xff]
        %v336 = vld [vmem:[%s117 + $0x630] sm:$0xff]
        %v337 = vld [vmem:[%s117 + $0x638] sm:$0xff]
        %v338 = vld [vmem:[%s117 + $0x640] sm:$0xff]
        %v339 = vld [vmem:[%s117 + $0x648] sm:$0xff]
        %v340 = vld [vmem:[%s117 + $0x650] sm:$0xff]
        %v341 = vld [vmem:[%s117 + $0x658] sm:$0xff]
        %v342 = vld [vmem:[%s117 + $0x660] sm:$0xff]
        %v343 = vld [vmem:[%s117 + $0x668] sm:$0xff]
        %v344 = vld [vmem:[%s117 + $0x670] sm:$0xff]
        %v345 = vld [vmem:[%s117 + $0x678] sm:$0xff]
        %v346 = vld [vmem:[%s117 + $0x680] sm:$0xff]
        %v347 = vld [vmem:[%s117 + $0x688] sm:$0xff]
        %v348 = vld [vmem:[%s117 + $0x690] sm:$0xff]
        %v349 = vld [vmem:[%s117 + $0x698] sm:$0xff]
        %v350 = vld [vmem:[%s117 + $0x6a0] sm:$0xff]
        %v351 = vld [vmem:[%s117 + $0x6a8] sm:$0xff]
        %v352 = vld [vmem:[%s117 + $0x6b0] sm:$0xff]
        %v353 = vld [vmem:[%s117 + $0x6b8] sm:$0xff]
        %v354 = vld [vmem:[%s117 + $0x6c0] sm:$0xff]
        %v355 = vld [vmem:[%s117 + $0x6c8] sm:$0xff]
        %v356 = vld [vmem:[%s117 + $0x6d0] sm:$0xff]
        %v357 = vld [vmem:[%s117 + $0x6d8] sm:$0xff]
        %v358 = vld [vmem:[%s117 + $0x6e0] sm:$0xff]
        %v359 = vld [vmem:[%s117 + $0x6e8] sm:$0xff]
        %v360 = vld [vmem:[%s117 + $0x6f0] sm:$0xff]
        %v361 = vld [vmem:[%s117 + $0x6f8] sm:$0xff]
        %v362 = vld [vmem:[%s117 + $0x700] sm:$0xff]
        %v363 = vld [vmem:[%s117 + $0x708] sm:$0xff]
        %v364 = vld [vmem:[%s117 + $0x710] sm:$0xff]
        %v365 = vld [vmem:[%s117 + $0x718] sm:$0xff]
        %v366 = vld [vmem:[%s117 + $0x720] sm:$0xff]
        %v367 = vld [vmem:[%s117 + $0x728] sm:$0xff]
        %v368 = vld [vmem:[%s117 + $0x730] sm:$0xff]
        %v369 = vld [vmem:[%s117 + $0x738] sm:$0xff]
        %v370 = vld [vmem:[%s117 + $0x740] sm:$0xff]
        %v371 = vld [vmem:[%s117 + $0x748] sm:$0xff]
        %v372 = vld [vmem:[%s117 + $0x750] sm:$0xff]
        %v373 = vld [vmem:[%s117 + $0x758] sm:$0xff]
        %v374 = vld [vmem:[%s117 + $0x760] sm:$0xff]
        %v375 = vld [vmem:[%s117 + $0x768] sm:$0xff]
        %v376 = vld [vmem:[%s117 + $0x770] sm:$0xff]
        %v377 = vld [vmem:[%s117 + $0x778] sm:$0xff]
        %v378 = vld [vmem:[%s117 + $0x780] sm:$0xff]
        %v379 = vld [vmem:[%s117 + $0x788] sm:$0xff]
        %v380 = vld [vmem:[%s117 + $0x790] sm:$0xff]
        %v381 = vld [vmem:[%s117 + $0x798] sm:$0xff]
        %v382 = vld [vmem:[%s117 + $0x7a0] sm:$0xff]
        %v383 = vld [vmem:[%s117 + $0x7a8] sm:$0xff]
        %v384 = vld [vmem:[%s117 + $0x7b0] sm:$0xff]
        %v385 = vld [vmem:[%s117 + $0x7b8] sm:$0xff]
        %v386 = vld [vmem:[%s117 + $0x7c0] sm:$0xff]
        %v387 = vld [vmem:[%s117 + $0x7c8] sm:$0xff]
        %v388 = vld [vmem:[%s117 + $0x7d0] sm:$0xff]
        %v389 = vld [vmem:[%s117 + $0x7d8] sm:$0xff]
        %v390 = vld [vmem:[%s117 + $0x7e0] sm:$0xff]
        %v391 = vld [vmem:[%s117 + $0x7e8] sm:$0xff]
        %v392 = vld [vmem:[%s117 + $0x7f0] sm:$0xff]
        %v393 = vld [vmem:[%s117 + $0x7f8] sm:$0xff]
        %v394 = vxor.u32 %v138, 2147483648
        %v395 = vxor.u32 %v139, 2147483648
        %v396 = vxor.u32 %v140, 2147483648
        %v397 = vxor.u32 %v141, 2147483648
        %v398 = vxor.u32 %v142, 2147483648
        %v399 = vxor.u32 %v143, 2147483648
        %v400 = vxor.u32 %v144, 2147483648
        %v401 = vxor.u32 %v145, 2147483648
        %v402 = vxor.u32 %v146, 2147483648
        %v403 = vxor.u32 %v147, 2147483648
        %v404 = vxor.u32 %v148, 2147483648
        %v405 = vxor.u32 %v149, 2147483648
        %v406 = vxor.u32 %v150, 2147483648
        %v407 = vxor.u32 %v151, 2147483648
        %v408 = vxor.u32 %v152, 2147483648
        %v409 = vxor.u32 %v153, 2147483648
        %v410 = vxor.u32 %v154, 2147483648
        %v411 = vxor.u32 %v155, 2147483648
        %v412 = vxor.u32 %v156, 2147483648
        %v413 = vxor.u32 %v157, 2147483648
        %v414 = vxor.u32 %v158, 2147483648
        %v415 = vxor.u32 %v159, 2147483648
        %v416 = vxor.u32 %v160, 2147483648
        %v417 = vxor.u32 %v161, 2147483648
        %v418 = vxor.u32 %v162, 2147483648
        %v419 = vxor.u32 %v163, 2147483648
        %v420 = vxor.u32 %v164, 2147483648
        %v421 = vxor.u32 %v165, 2147483648
        %v422 = vxor.u32 %v166, 2147483648
        %v423 = vxor.u32 %v167, 2147483648
        %v424 = vxor.u32 %v168, 2147483648
        %v425 = vxor.u32 %v169, 2147483648
        %v426 = vxor.u32 %v170, 2147483648
        %v427 = vxor.u32 %v171, 2147483648
        %v428 = vxor.u32 %v172, 2147483648
        %v429 = vxor.u32 %v173, 2147483648
        %v430 = vxor.u32 %v174, 2147483648
        %v431 = vxor.u32 %v175, 2147483648
        %v432 = vxor.u32 %v176, 2147483648
        %v433 = vxor.u32 %v177, 2147483648
        %v434 = vxor.u32 %v178, 2147483648
        %v435 = vxor.u32 %v179, 2147483648
        %v436 = vxor.u32 %v180, 2147483648
        %v437 = vxor.u32 %v181, 2147483648
        %v438 = vxor.u32 %v182, 2147483648
        %v439 = vxor.u32 %v183, 2147483648
        %v440 = vxor.u32 %v184, 2147483648
        %v441 = vxor.u32 %v185, 2147483648
        %v442 = vxor.u32 %v186, 2147483648
        %v443 = vxor.u32 %v187, 2147483648
        %v444 = vxor.u32 %v188, 2147483648
        %v445 = vxor.u32 %v189, 2147483648
        %v446 = vxor.u32 %v190, 2147483648
        %v447 = vxor.u32 %v191, 2147483648
        %v448 = vxor.u32 %v192, 2147483648
        %v449 = vxor.u32 %v193, 2147483648
        %v450 = vxor.u32 %v194, 2147483648
        %v451 = vxor.u32 %v195, 2147483648
        %v452 = vxor.u32 %v196, 2147483648
        %v453 = vxor.u32 %v197, 2147483648
        %v454 = vxor.u32 %v198, 2147483648
        %v455 = vxor.u32 %v199, 2147483648
        %v456 = vxor.u32 %v200, 2147483648
        %v457 = vxor.u32 %v201, 2147483648
        %v458 = vxor.u32 %v202, 2147483648
        %v459 = vxor.u32 %v203, 2147483648
        %v460 = vxor.u32 %v204, 2147483648
        %v461 = vxor.u32 %v205, 2147483648
        %v462 = vxor.u32 %v206, 2147483648
        %v463 = vxor.u32 %v207, 2147483648
        %v464 = vxor.u32 %v208, 2147483648
        %v465 = vxor.u32 %v209, 2147483648
        %v466 = vxor.u32 %v210, 2147483648
        %v467 = vxor.u32 %v211, 2147483648
        %v468 = vxor.u32 %v212, 2147483648
        %v469 = vxor.u32 %v213, 2147483648
        %v470 = vxor.u32 %v214, 2147483648
        %v471 = vxor.u32 %v215, 2147483648
        %v472 = vxor.u32 %v216, 2147483648
        %v473 = vxor.u32 %v217, 2147483648
        %v474 = vxor.u32 %v218, 2147483648
        %v475 = vxor.u32 %v219, 2147483648
        %v476 = vxor.u32 %v220, 2147483648
        %v477 = vxor.u32 %v221, 2147483648
        %v478 = vxor.u32 %v222, 2147483648
        %v479 = vxor.u32 %v223, 2147483648
        %v480 = vxor.u32 %v224, 2147483648
        %v481 = vxor.u32 %v225, 2147483648
        %v482 = vxor.u32 %v226, 2147483648
        %v483 = vxor.u32 %v227, 2147483648
        %v484 = vxor.u32 %v228, 2147483648
        %v485 = vxor.u32 %v229, 2147483648
        %v486 = vxor.u32 %v230, 2147483648
        %v487 = vxor.u32 %v231, 2147483648
        %v488 = vxor.u32 %v232, 2147483648
        %v489 = vxor.u32 %v233, 2147483648
        %v490 = vxor.u32 %v234, 2147483648
        %v491 = vxor.u32 %v235, 2147483648
        %v492 = vxor.u32 %v236, 2147483648
        %v493 = vxor.u32 %v237, 2147483648
        %v494 = vxor.u32 %v238, 2147483648
        %v495 = vxor.u32 %v239, 2147483648
        %v496 = vxor.u32 %v240, 2147483648
        %v497 = vxor.u32 %v241, 2147483648
        %v498 = vxor.u32 %v242, 2147483648
        %v499 = vxor.u32 %v243, 2147483648
        %v500 = vxor.u32 %v244, 2147483648
        %v501 = vxor.u32 %v245, 2147483648
        %v502 = vxor.u32 %v246, 2147483648
        %v503 = vxor.u32 %v247, 2147483648
        %v504 = vxor.u32 %v248, 2147483648
        %v505 = vxor.u32 %v249, 2147483648
        %v506 = vxor.u32 %v250, 2147483648
        %v507 = vxor.u32 %v251, 2147483648
        %v508 = vxor.u32 %v252, 2147483648
        %v509 = vxor.u32 %v253, 2147483648
        %v510 = vxor.u32 %v254, 2147483648
        %v511 = vxor.u32 %v255, 2147483648
        %v512 = vxor.u32 %v256, 2147483648
        %v513 = vxor.u32 %v257, 2147483648
        %v514 = vxor.u32 %v258, 2147483648
        %v515 = vxor.u32 %v259, 2147483648
        %v516 = vxor.u32 %v260, 2147483648
        %v517 = vxor.u32 %v261, 2147483648
        %v518 = vxor.u32 %v262, 2147483648
        %v519 = vxor.u32 %v263, 2147483648
        %v520 = vxor.u32 %v264, 2147483648
        %v521 = vxor.u32 %v265, 2147483648
        %v522 = vxor.u32 %v266, 2147483648
        %v523 = vxor.u32 %v267, 2147483648
        %v524 = vxor.u32 %v268, 2147483648
        %v525 = vxor.u32 %v269, 2147483648
        %v526 = vxor.u32 %v270, 2147483648
        %v527 = vxor.u32 %v271, 2147483648
        %v528 = vxor.u32 %v272, 2147483648
        %v529 = vxor.u32 %v273, 2147483648
        %v530 = vxor.u32 %v274, 2147483648
        %v531 = vxor.u32 %v275, 2147483648
        %v532 = vxor.u32 %v276, 2147483648
        %v533 = vxor.u32 %v277, 2147483648
        %v534 = vxor.u32 %v278, 2147483648
        %v535 = vxor.u32 %v279, 2147483648
        %v536 = vxor.u32 %v280, 2147483648
        %v537 = vxor.u32 %v281, 2147483648
        %v538 = vxor.u32 %v282, 2147483648
        %v539 = vxor.u32 %v283, 2147483648
        %v540 = vxor.u32 %v284, 2147483648
        %v541 = vxor.u32 %v285, 2147483648
        %v542 = vxor.u32 %v286, 2147483648
        %v543 = vxor.u32 %v287, 2147483648
        %v544 = vxor.u32 %v288, 2147483648
        %v545 = vxor.u32 %v289, 2147483648
        %v546 = vxor.u32 %v290, 2147483648
        %v547 = vxor.u32 %v291, 2147483648
        %v548 = vxor.u32 %v292, 2147483648
        %v549 = vxor.u32 %v293, 2147483648
        %v550 = vxor.u32 %v294, 2147483648
        %v551 = vxor.u32 %v295, 2147483648
        %v552 = vxor.u32 %v296, 2147483648
        %v553 = vxor.u32 %v297, 2147483648
        %v554 = vxor.u32 %v298, 2147483648
        %v555 = vxor.u32 %v299, 2147483648
        %v556 = vxor.u32 %v300, 2147483648
        %v557 = vxor.u32 %v301, 2147483648
        %v558 = vxor.u32 %v302, 2147483648
        %v559 = vxor.u32 %v303, 2147483648
        %v560 = vxor.u32 %v304, 2147483648
        %v561 = vxor.u32 %v305, 2147483648
        %v562 = vxor.u32 %v306, 2147483648
        %v563 = vxor.u32 %v307, 2147483648
        %v564 = vxor.u32 %v308, 2147483648
        %v565 = vxor.u32 %v309, 2147483648
        %v566 = vxor.u32 %v310, 2147483648
        %v567 = vxor.u32 %v311, 2147483648
        %v568 = vxor.u32 %v312, 2147483648
        %v569 = vxor.u32 %v313, 2147483648
        %v570 = vxor.u32 %v314, 2147483648
        %v571 = vxor.u32 %v315, 2147483648
        %v572 = vxor.u32 %v316, 2147483648
        %v573 = vxor.u32 %v317, 2147483648
        %v574 = vxor.u32 %v318, 2147483648
        %v575 = vxor.u32 %v319, 2147483648
        %v576 = vxor.u32 %v320, 2147483648
        %v577 = vxor.u32 %v321, 2147483648
        %v578 = vxor.u32 %v322, 2147483648
        %v579 = vxor.u32 %v323, 2147483648
        %v580 = vxor.u32 %v324, 2147483648
        %v581 = vxor.u32 %v325, 2147483648
        %v582 = vxor.u32 %v326, 2147483648
        %v583 = vxor.u32 %v327, 2147483648
        %v584 = vxor.u32 %v328, 2147483648
        %v585 = vxor.u32 %v329, 2147483648
        %v586 = vxor.u32 %v330, 2147483648
        %v587 = vxor.u32 %v331, 2147483648
        %v588 = vxor.u32 %v332, 2147483648
        %v589 = vxor.u32 %v333, 2147483648
        %v590 = vxor.u32 %v334, 2147483648
        %v591 = vxor.u32 %v335, 2147483648
        %v592 = vxor.u32 %v336, 2147483648
        %v593 = vxor.u32 %v337, 2147483648
        %v594 = vxor.u32 %v338, 2147483648
        %v595 = vxor.u32 %v339, 2147483648
        %v596 = vxor.u32 %v340, 2147483648
        %v597 = vxor.u32 %v341, 2147483648
        %v598 = vxor.u32 %v342, 2147483648
        %v599 = vxor.u32 %v343, 2147483648
        %v600 = vxor.u32 %v344, 2147483648
        %v601 = vxor.u32 %v345, 2147483648
        %v602 = vxor.u32 %v346, 2147483648
        %v603 = vxor.u32 %v347, 2147483648
        %v604 = vxor.u32 %v348, 2147483648
        %v605 = vxor.u32 %v349, 2147483648
        %v606 = vxor.u32 %v350, 2147483648
        %v607 = vxor.u32 %v351, 2147483648
        %v608 = vxor.u32 %v352, 2147483648
        %v609 = vxor.u32 %v353, 2147483648
        %v610 = vxor.u32 %v354, 2147483648
        %v611 = vxor.u32 %v355, 2147483648
        %v612 = vxor.u32 %v356, 2147483648
        %v613 = vxor.u32 %v357, 2147483648
        %v614 = vxor.u32 %v358, 2147483648
        %v615 = vxor.u32 %v359, 2147483648
        %v616 = vxor.u32 %v360, 2147483648
        %v617 = vxor.u32 %v361, 2147483648
        %v618 = vxor.u32 %v362, 2147483648
        %v619 = vxor.u32 %v363, 2147483648
        %v620 = vxor.u32 %v364, 2147483648
        %v621 = vxor.u32 %v365, 2147483648
        %v622 = vxor.u32 %v366, 2147483648
        %v623 = vxor.u32 %v367, 2147483648
        %v624 = vxor.u32 %v368, 2147483648
        %v625 = vxor.u32 %v369, 2147483648
        %v626 = vxor.u32 %v370, 2147483648
        %v627 = vxor.u32 %v371, 2147483648
        %v628 = vxor.u32 %v372, 2147483648
        %v629 = vxor.u32 %v373, 2147483648
        %v630 = vxor.u32 %v374, 2147483648
        %v631 = vxor.u32 %v375, 2147483648
        %v632 = vxor.u32 %v376, 2147483648
        %v633 = vxor.u32 %v377, 2147483648
        %v634 = vxor.u32 %v378, 2147483648
        %v635 = vxor.u32 %v379, 2147483648
        %v636 = vxor.u32 %v380, 2147483648
        %v637 = vxor.u32 %v381, 2147483648
        %v638 = vxor.u32 %v382, 2147483648
        %v639 = vxor.u32 %v383, 2147483648
        %v640 = vxor.u32 %v384, 2147483648
        %v641 = vxor.u32 %v385, 2147483648
        %v642 = vxor.u32 %v386, 2147483648
        %v643 = vxor.u32 %v387, 2147483648
        %v644 = vxor.u32 %v388, 2147483648
        %v645 = vxor.u32 %v389, 2147483648
        %v646 = vxor.u32 %v390, 2147483648
        %v647 = vxor.u32 %v391, 2147483648
        %v648 = vxor.u32 %v392, 2147483648
        %v649 = vxor.u32 %v393, 2147483648
        %v650 = vmul.f32 %v394, 1.442695
        %v651 = vpow.pop %v650
        %v652 = vmul.f32 %v395, 1.442695
        %v653 = vpow.pop %v652
        %v654 = vmul.f32 %v396, 1.442695
        %v655 = vpow.pop %v654
        %v656 = vmul.f32 %v397, 1.442695
        %v657 = vpow.pop %v656
        %v658 = vmul.f32 %v398, 1.442695
        %v659 = vpow.pop %v658
        %v660 = vmul.f32 %v399, 1.442695
        %v661 = vpow.pop %v660
        %v662 = vmul.f32 %v400, 1.442695
        %v663 = vpow.pop %v662
        %v664 = vmul.f32 %v401, 1.442695
        %v665 = vpow.pop %v664
        %v666 = vmul.f32 %v402, 1.442695
        %v667 = vpow.pop %v666
        %v668 = vmul.f32 %v403, 1.442695
        %v669 = vpow.pop %v668
        %v670 = vmul.f32 %v404, 1.442695
        %v671 = vpow.pop %v670
        %v672 = vmul.f32 %v405, 1.442695
        %v673 = vpow.pop %v672
        %v674 = vmul.f32 %v406, 1.442695
        %v675 = vpow.pop %v674
        %v676 = vmul.f32 %v407, 1.442695
        %v677 = vpow.pop %v676
        %v678 = vmul.f32 %v408, 1.442695
        %v679 = vpow.pop %v678
        %v680 = vmul.f32 %v409, 1.442695
        %v681 = vpow.pop %v680
        %v682 = vmul.f32 %v410, 1.442695
        %v683 = vpow.pop %v682
        %v684 = vmul.f32 %v411, 1.442695
        %v685 = vpow.pop %v684
        %v686 = vmul.f32 %v412, 1.442695
        %v687 = vpow.pop %v686
        %v688 = vmul.f32 %v413, 1.442695
        %v689 = vpow.pop %v688
        %v690 = vmul.f32 %v414, 1.442695
        %v691 = vpow.pop %v690
        %v692 = vmul.f32 %v415, 1.442695
        %v693 = vpow.pop %v692
        %v694 = vmul.f32 %v416, 1.442695
        %v695 = vpow.pop %v694
        %v696 = vmul.f32 %v417, 1.442695
        %v697 = vpow.pop %v696
        %v698 = vmul.f32 %v418, 1.442695
        %v699 = vpow.pop %v698
        %v700 = vmul.f32 %v419, 1.442695
        %v701 = vpow.pop %v700
        %v702 = vmul.f32 %v420, 1.442695
        %v703 = vpow.pop %v702
        %v704 = vmul.f32 %v421, 1.442695
        %v705 = vpow.pop %v704
        %v706 = vmul.f32 %v422, 1.442695
        %v707 = vpow.pop %v706
        %v708 = vmul.f32 %v423, 1.442695
        %v709 = vpow.pop %v708
        %v710 = vmul.f32 %v424, 1.442695
        %v711 = vpow.pop %v710
        %v712 = vmul.f32 %v425, 1.442695
        %v713 = vpow.pop %v712
        %v714 = vmul.f32 %v426, 1.442695
        %v715 = vpow.pop %v714
        %v716 = vmul.f32 %v427, 1.442695
        %v717 = vpow.pop %v716
        %v718 = vmul.f32 %v428, 1.442695
        %v719 = vpow.pop %v718
        %v720 = vmul.f32 %v429, 1.442695
        %v721 = vpow.pop %v720
        %v722 = vmul.f32 %v430, 1.442695
        %v723 = vpow.pop %v722
        %v724 = vmul.f32 %v431, 1.442695
        %v725 = vpow.pop %v724
        %v726 = vmul.f32 %v432, 1.442695
        %v727 = vpow.pop %v726
        %v728 = vmul.f32 %v433, 1.442695
        %v729 = vpow.pop %v728
        %v730 = vmul.f32 %v434, 1.442695
        %v731 = vpow.pop %v730
        %v732 = vmul.f32 %v435, 1.442695
        %v733 = vpow.pop %v732
        %v734 = vmul.f32 %v436, 1.442695
        %v735 = vpow.pop %v734
        %v736 = vmul.f32 %v437, 1.442695
        %v737 = vpow.pop %v736
        %v738 = vmul.f32 %v438, 1.442695
        %v739 = vpow.pop %v738
        %v740 = vmul.f32 %v439, 1.442695
        %v741 = vpow.pop %v740
        %v742 = vmul.f32 %v440, 1.442695
        %v743 = vpow.pop %v742
        %v744 = vmul.f32 %v441, 1.442695
        %v745 = vpow.pop %v744
        %v746 = vmul.f32 %v442, 1.442695
        %v747 = vpow.pop %v746
        %v748 = vmul.f32 %v443, 1.442695
        %v749 = vpow.pop %v748
        %v750 = vmul.f32 %v444, 1.442695
        %v751 = vpow.pop %v750
        %v752 = vmul.f32 %v445, 1.442695
        %v753 = vpow.pop %v752
        %v754 = vmul.f32 %v446, 1.442695
        %v755 = vpow.pop %v754
        %v756 = vmul.f32 %v447, 1.442695
        %v757 = vpow.pop %v756
        %v758 = vmul.f32 %v448, 1.442695
        %v759 = vpow.pop %v758
        %v760 = vmul.f32 %v449, 1.442695
        %v761 = vpow.pop %v760
        %v762 = vmul.f32 %v450, 1.442695
        %v763 = vpow.pop %v762
        %v764 = vmul.f32 %v451, 1.442695
        %v765 = vpow.pop %v764
        %v766 = vmul.f32 %v452, 1.442695
        %v767 = vpow.pop %v766
        %v768 = vmul.f32 %v453, 1.442695
        %v769 = vpow.pop %v768
        %v770 = vmul.f32 %v454, 1.442695
        %v771 = vpow.pop %v770
        %v772 = vmul.f32 %v455, 1.442695
        %v773 = vpow.pop %v772
        %v774 = vmul.f32 %v456, 1.442695
        %v775 = vpow.pop %v774
        %v776 = vmul.f32 %v457, 1.442695
        %v777 = vpow.pop %v776
        %v778 = vmul.f32 %v458, 1.442695
        %v779 = vpow.pop %v778
        %v780 = vmul.f32 %v459, 1.442695
        %v781 = vpow.pop %v780
        %v782 = vmul.f32 %v460, 1.442695
        %v783 = vpow.pop %v782
        %v784 = vmul.f32 %v461, 1.442695
        %v785 = vpow.pop %v784
        %v786 = vmul.f32 %v462, 1.442695
        %v787 = vpow.pop %v786
        %v788 = vmul.f32 %v463, 1.442695
        %v789 = vpow.pop %v788
        %v790 = vmul.f32 %v464, 1.442695
        %v791 = vpow.pop %v790
        %v792 = vmul.f32 %v465, 1.442695
        %v793 = vpow.pop %v792
        %v794 = vmul.f32 %v466, 1.442695
        %v795 = vpow.pop %v794
        %v796 = vmul.f32 %v467, 1.442695
        %v797 = vpow.pop %v796
        %v798 = vmul.f32 %v468, 1.442695
        %v799 = vpow.pop %v798
        %v800 = vmul.f32 %v469, 1.442695
        %v801 = vpow.pop %v800
        %v802 = vmul.f32 %v470, 1.442695
        %v803 = vpow.pop %v802
        %v804 = vmul.f32 %v471, 1.442695
        %v805 = vpow.pop %v804
        %v806 = vmul.f32 %v472, 1.442695
        %v807 = vpow.pop %v806
        %v808 = vmul.f32 %v473, 1.442695
        %v809 = vpow.pop %v808
        %v810 = vmul.f32 %v474, 1.442695
        %v811 = vpow.pop %v810
        %v812 = vmul.f32 %v475, 1.442695
        %v813 = vpow.pop %v812
        %v814 = vmul.f32 %v476, 1.442695
        %v815 = vpow.pop %v814
        %v816 = vmul.f32 %v477, 1.442695
        %v817 = vpow.pop %v816
        %v818 = vmul.f32 %v478, 1.442695
        %v819 = vpow.pop %v818
        %v820 = vmul.f32 %v479, 1.442695
        %v821 = vpow.pop %v820
        %v822 = vmul.f32 %v480, 1.442695
        %v823 = vpow.pop %v822
        %v824 = vmul.f32 %v481, 1.442695
        %v825 = vpow.pop %v824
        %v826 = vmul.f32 %v482, 1.442695
        %v827 = vpow.pop %v826
        %v828 = vmul.f32 %v483, 1.442695
        %v829 = vpow.pop %v828
        %v830 = vmul.f32 %v484, 1.442695
        %v831 = vpow.pop %v830
        %v832 = vmul.f32 %v485, 1.442695
        %v833 = vpow.pop %v832
        %v834 = vmul.f32 %v486, 1.442695
        %v835 = vpow.pop %v834
        %v836 = vmul.f32 %v487, 1.442695
        %v837 = vpow.pop %v836
        %v838 = vmul.f32 %v488, 1.442695
        %v839 = vpow.pop %v838
        %v840 = vmul.f32 %v489, 1.442695
        %v841 = vpow.pop %v840
        %v842 = vmul.f32 %v490, 1.442695
        %v843 = vpow.pop %v842
        %v844 = vmul.f32 %v491, 1.442695
        %v845 = vpow.pop %v844
        %v846 = vmul.f32 %v492, 1.442695
        %v847 = vpow.pop %v846
        %v848 = vmul.f32 %v493, 1.442695
        %v849 = vpow.pop %v848
        %v850 = vmul.f32 %v494, 1.442695
        %v851 = vpow.pop %v850
        %v852 = vmul.f32 %v495, 1.442695
        %v853 = vpow.pop %v852
        %v854 = vmul.f32 %v496, 1.442695
        %v855 = vpow.pop %v854
        %v856 = vmul.f32 %v497, 1.442695
        %v857 = vpow.pop %v856
        %v858 = vmul.f32 %v498, 1.442695
        %v859 = vpow.pop %v858
        %v860 = vmul.f32 %v499, 1.442695
        %v861 = vpow.pop %v860
        %v862 = vmul.f32 %v500, 1.442695
        %v863 = vpow.pop %v862
        %v864 = vmul.f32 %v501, 1.442695
        %v865 = vpow.pop %v864
        %v866 = vmul.f32 %v502, 1.442695
        %v867 = vpow.pop %v866
        %v868 = vmul.f32 %v503, 1.442695
        %v869 = vpow.pop %v868
        %v870 = vmul.f32 %v504, 1.442695
        %v871 = vpow.pop %v870
        %v872 = vmul.f32 %v505, 1.442695
        %v873 = vpow.pop %v872
        %v874 = vmul.f32 %v506, 1.442695
        %v875 = vpow.pop %v874
        %v876 = vmul.f32 %v507, 1.442695
        %v877 = vpow.pop %v876
        %v878 = vmul.f32 %v508, 1.442695
        %v879 = vpow.pop %v878
        %v880 = vmul.f32 %v509, 1.442695
        %v881 = vpow.pop %v880
        %v882 = vmul.f32 %v510, 1.442695
        %v883 = vpow.pop %v882
        %v884 = vmul.f32 %v511, 1.442695
        %v885 = vpow.pop %v884
        %v886 = vmul.f32 %v512, 1.442695
        %v887 = vpow.pop %v886
        %v888 = vmul.f32 %v513, 1.442695
        %v889 = vpow.pop %v888
        %v890 = vmul.f32 %v514, 1.442695
        %v891 = vpow.pop %v890
        %v892 = vmul.f32 %v515, 1.442695
        %v893 = vpow.pop %v892
        %v894 = vmul.f32 %v516, 1.442695
        %v895 = vpow.pop %v894
        %v896 = vmul.f32 %v517, 1.442695
        %v897 = vpow.pop %v896
        %v898 = vmul.f32 %v518, 1.442695
        %v899 = vpow.pop %v898
        %v900 = vmul.f32 %v519, 1.442695
        %v901 = vpow.pop %v900
        %v902 = vmul.f32 %v520, 1.442695
        %v903 = vpow.pop %v902
        %v904 = vmul.f32 %v521, 1.442695
        %v905 = vpow.pop %v904
        %v906 = vmul.f32 %v522, 1.442695
        %v907 = vpow.pop %v906
        %v908 = vmul.f32 %v523, 1.442695
        %v909 = vpow.pop %v908
        %v910 = vmul.f32 %v524, 1.442695
        %v911 = vpow.pop %v910
        %v912 = vmul.f32 %v525, 1.442695
        %v913 = vpow.pop %v912
        %v914 = vmul.f32 %v526, 1.442695
        %v915 = vpow.pop %v914
        %v916 = vmul.f32 %v527, 1.442695
        %v917 = vpow.pop %v916
        %v918 = vmul.f32 %v528, 1.442695
        %v919 = vpow.pop %v918
        %v920 = vmul.f32 %v529, 1.442695
        %v921 = vpow.pop %v920
        %v922 = vmul.f32 %v530, 1.442695
        %v923 = vpow.pop %v922
        %v924 = vmul.f32 %v531, 1.442695
        %v925 = vpow.pop %v924
        %v926 = vmul.f32 %v532, 1.442695
        %v927 = vpow.pop %v926
        %v928 = vmul.f32 %v533, 1.442695
        %v929 = vpow.pop %v928
        %v930 = vmul.f32 %v534, 1.442695
        %v931 = vpow.pop %v930
        %v932 = vmul.f32 %v535, 1.442695
        %v933 = vpow.pop %v932
        %v934 = vmul.f32 %v536, 1.442695
        %v935 = vpow.pop %v934
        %v936 = vmul.f32 %v537, 1.442695
        %v937 = vpow.pop %v936
        %v938 = vmul.f32 %v538, 1.442695
        %v939 = vpow.pop %v938
        %v940 = vmul.f32 %v539, 1.442695
        %v941 = vpow.pop %v940
        %v942 = vmul.f32 %v540, 1.442695
        %v943 = vpow.pop %v942
        %v944 = vmul.f32 %v541, 1.442695
        %v945 = vpow.pop %v944
        %v946 = vmul.f32 %v542, 1.442695
        %v947 = vpow.pop %v946
        %v948 = vmul.f32 %v543, 1.442695
        %v949 = vpow.pop %v948
        %v950 = vmul.f32 %v544, 1.442695
        %v951 = vpow.pop %v950
        %v952 = vmul.f32 %v545, 1.442695
        %v953 = vpow.pop %v952
        %v954 = vmul.f32 %v546, 1.442695
        %v955 = vpow.pop %v954
        %v956 = vmul.f32 %v547, 1.442695
        %v957 = vpow.pop %v956
        %v958 = vmul.f32 %v548, 1.442695
        %v959 = vpow.pop %v958
        %v960 = vmul.f32 %v549, 1.442695
        %v961 = vpow.pop %v960
        %v962 = vmul.f32 %v550, 1.442695
        %v963 = vpow.pop %v962
        %v964 = vmul.f32 %v551, 1.442695
        %v965 = vpow.pop %v964
        %v966 = vmul.f32 %v552, 1.442695
        %v967 = vpow.pop %v966
        %v968 = vmul.f32 %v553, 1.442695
        %v969 = vpow.pop %v968
        %v970 = vmul.f32 %v554, 1.442695
        %v971 = vpow.pop %v970
        %v972 = vmul.f32 %v555, 1.442695
        %v973 = vpow.pop %v972
        %v974 = vmul.f32 %v556, 1.442695
        %v975 = vpow.pop %v974
        %v976 = vmul.f32 %v557, 1.442695
        %v977 = vpow.pop %v976
        %v978 = vmul.f32 %v558, 1.442695
        %v979 = vpow.pop %v978
        %v980 = vmul.f32 %v559, 1.442695
        %v981 = vpow.pop %v980
        %v982 = vmul.f32 %v560, 1.442695
        %v983 = vpow.pop %v982
        %v984 = vmul.f32 %v561, 1.442695
        %v985 = vpow.pop %v984
        %v986 = vmul.f32 %v562, 1.442695
        %v987 = vpow.pop %v986
        %v988 = vmul.f32 %v563, 1.442695
        %v989 = vpow.pop %v988
        %v990 = vmul.f32 %v564, 1.442695
        %v991 = vpow.pop %v990
        %v992 = vmul.f32 %v565, 1.442695
        %v993 = vpow.pop %v992
        %v994 = vmul.f32 %v566, 1.442695
        %v995 = vpow.pop %v994
        %v996 = vmul.f32 %v567, 1.442695
        %v997 = vpow.pop %v996
        %v998 = vmul.f32 %v568, 1.442695
        %v999 = vpow.pop %v998
        %v1000 = vmul.f32 %v569, 1.442695
        %v1001 = vpow.pop %v1000
        %v1002 = vmul.f32 %v570, 1.442695
        %v1003 = vpow.pop %v1002
        %v1004 = vmul.f32 %v571, 1.442695
        %v1005 = vpow.pop %v1004
        %v1006 = vmul.f32 %v572, 1.442695
        %v1007 = vpow.pop %v1006
        %v1008 = vmul.f32 %v573, 1.442695
        %v1009 = vpow.pop %v1008
        %v1010 = vmul.f32 %v574, 1.442695
        %v1011 = vpow.pop %v1010
        %v1012 = vmul.f32 %v575, 1.442695
        %v1013 = vpow.pop %v1012
        %v1014 = vmul.f32 %v576, 1.442695
        %v1015 = vpow.pop %v1014
        %v1016 = vmul.f32 %v577, 1.442695
        %v1017 = vpow.pop %v1016
        %v1018 = vmul.f32 %v578, 1.442695
        %v1019 = vpow.pop %v1018
        %v1020 = vmul.f32 %v579, 1.442695
        %v1021 = vpow.pop %v1020
        %v1022 = vmul.f32 %v580, 1.442695
        %v1023 = vpow.pop %v1022
        %v1024 = vmul.f32 %v581, 1.442695
        %v1025 = vpow.pop %v1024
        %v1026 = vmul.f32 %v582, 1.442695
        %v1027 = vpow.pop %v1026
        %v1028 = vmul.f32 %v583, 1.442695
        %v1029 = vpow.pop %v1028
        %v1030 = vmul.f32 %v584, 1.442695
        %v1031 = vpow.pop %v1030
        %v1032 = vmul.f32 %v585, 1.442695
        %v1033 = vpow.pop %v1032
        %v1034 = vmul.f32 %v586, 1.442695
        %v1035 = vpow.pop %v1034
        %v1036 = vmul.f32 %v587, 1.442695
        %v1037 = vpow.pop %v1036
        %v1038 = vmul.f32 %v588, 1.442695
        %v1039 = vpow.pop %v1038
        %v1040 = vmul.f32 %v589, 1.442695
        %v1041 = vpow.pop %v1040
        %v1042 = vmul.f32 %v590, 1.442695
        %v1043 = vpow.pop %v1042
        %v1044 = vmul.f32 %v591, 1.442695
        %v1045 = vpow.pop %v1044
        %v1046 = vmul.f32 %v592, 1.442695
        %v1047 = vpow.pop %v1046
        %v1048 = vmul.f32 %v593, 1.442695
        %v1049 = vpow.pop %v1048
        %v1050 = vmul.f32 %v594, 1.442695
        %v1051 = vpow.pop %v1050
        %v1052 = vmul.f32 %v595, 1.442695
        %v1053 = vpow.pop %v1052
        %v1054 = vmul.f32 %v596, 1.442695
        %v1055 = vpow.pop %v1054
        %v1056 = vmul.f32 %v597, 1.442695
        %v1057 = vpow.pop %v1056
        %v1058 = vmul.f32 %v598, 1.442695
        %v1059 = vpow.pop %v1058
        %v1060 = vmul.f32 %v599, 1.442695
        %v1061 = vpow.pop %v1060
        %v1062 = vmul.f32 %v600, 1.442695
        %v1063 = vpow.pop %v1062
        %v1064 = vmul.f32 %v601, 1.442695
        %v1065 = vpow.pop %v1064
        %v1066 = vmul.f32 %v602, 1.442695
        %v1067 = vpow.pop %v1066
        %v1068 = vmul.f32 %v603, 1.442695
        %v1069 = vpow.pop %v1068
        %v1070 = vmul.f32 %v604, 1.442695
        %v1071 = vpow.pop %v1070
        %v1072 = vmul.f32 %v605, 1.442695
        %v1073 = vpow.pop %v1072
        %v1074 = vmul.f32 %v606, 1.442695
        %v1075 = vpow.pop %v1074
        %v1076 = vmul.f32 %v607, 1.442695
        %v1077 = vpow.pop %v1076
        %v1078 = vmul.f32 %v608, 1.442695
        %v1079 = vpow.pop %v1078
        %v1080 = vmul.f32 %v609, 1.442695
        %v1081 = vpow.pop %v1080
        %v1082 = vmul.f32 %v610, 1.442695
        %v1083 = vpow.pop %v1082
        %v1084 = vmul.f32 %v611, 1.442695
        %v1085 = vpow.pop %v1084
        %v1086 = vmul.f32 %v612, 1.442695
        %v1087 = vpow.pop %v1086
        %v1088 = vmul.f32 %v613, 1.442695
        %v1089 = vpow.pop %v1088
        %v1090 = vmul.f32 %v614, 1.442695
        %v1091 = vpow.pop %v1090
        %v1092 = vmul.f32 %v615, 1.442695
        %v1093 = vpow.pop %v1092
        %v1094 = vmul.f32 %v616, 1.442695
        %v1095 = vpow.pop %v1094
        %v1096 = vmul.f32 %v617, 1.442695
        %v1097 = vpow.pop %v1096
        %v1098 = vmul.f32 %v618, 1.442695
        %v1099 = vpow.pop %v1098
        %v1100 = vmul.f32 %v619, 1.442695
        %v1101 = vpow.pop %v1100
        %v1102 = vmul.f32 %v620, 1.442695
        %v1103 = vpow.pop %v1102
        %v1104 = vmul.f32 %v621, 1.442695
        %v1105 = vpow.pop %v1104
        %v1106 = vmul.f32 %v622, 1.442695
        %v1107 = vpow.pop %v1106
        %v1108 = vmul.f32 %v623, 1.442695
        %v1109 = vpow.pop %v1108
        %v1110 = vmul.f32 %v624, 1.442695
        %v1111 = vpow.pop %v1110
        %v1112 = vmul.f32 %v625, 1.442695
        %v1113 = vpow.pop %v1112
        %v1114 = vmul.f32 %v626, 1.442695
        %v1115 = vpow.pop %v1114
        %v1116 = vmul.f32 %v627, 1.442695
        %v1117 = vpow.pop %v1116
        %v1118 = vmul.f32 %v628, 1.442695
        %v1119 = vpow.pop %v1118
        %v1120 = vmul.f32 %v629, 1.442695
        %v1121 = vpow.pop %v1120
        %v1122 = vmul.f32 %v630, 1.442695
        %v1123 = vpow.pop %v1122
        %v1124 = vmul.f32 %v631, 1.442695
        %v1125 = vpow.pop %v1124
        %v1126 = vmul.f32 %v632, 1.442695
        %v1127 = vpow.pop %v1126
        %v1128 = vmul.f32 %v633, 1.442695
        %v1129 = vpow.pop %v1128
        %v1130 = vmul.f32 %v634, 1.442695
        %v1131 = vpow.pop %v1130
        %v1132 = vmul.f32 %v635, 1.442695
        %v1133 = vpow.pop %v1132
        %v1134 = vmul.f32 %v636, 1.442695
        %v1135 = vpow.pop %v1134
        %v1136 = vmul.f32 %v637, 1.442695
        %v1137 = vpow.pop %v1136
        %v1138 = vmul.f32 %v638, 1.442695
        %v1139 = vpow.pop %v1138
        %v1140 = vmul.f32 %v639, 1.442695
        %v1141 = vpow.pop %v1140
        %v1142 = vmul.f32 %v640, 1.442695
        %v1143 = vpow.pop %v1142
        %v1144 = vmul.f32 %v641, 1.442695
        %v1145 = vpow.pop %v1144
        %v1146 = vmul.f32 %v642, 1.442695
        %v1147 = vpow.pop %v1146
        %v1148 = vmul.f32 %v643, 1.442695
        %v1149 = vpow.pop %v1148
        %v1150 = vmul.f32 %v644, 1.442695
        %v1151 = vpow.pop %v1150
        %v1152 = vmul.f32 %v645, 1.442695
        %v1153 = vpow.pop %v1152
        %v1154 = vmul.f32 %v646, 1.442695
        %v1155 = vpow.pop %v1154
        %v1156 = vmul.f32 %v647, 1.442695
        %v1157 = vpow.pop %v1156
        %v1158 = vmul.f32 %v648, 1.442695
        %v1159 = vpow.pop %v1158
        %v1160 = vmul.f32 %v649, 1.442695
        %v1161 = vpow.pop %v1160
        %v1162 = vadd.f32 %v651, 1.0
        %v1163 = vadd.f32 %v653, 1.0
        %v1164 = vadd.f32 %v655, 1.0
        %v1165 = vadd.f32 %v657, 1.0
        %v1166 = vadd.f32 %v659, 1.0
        %v1167 = vadd.f32 %v661, 1.0
        %v1168 = vadd.f32 %v663, 1.0
        %v1169 = vadd.f32 %v665, 1.0
        %v1170 = vadd.f32 %v667, 1.0
        %v1171 = vadd.f32 %v669, 1.0
        %v1172 = vadd.f32 %v671, 1.0
        %v1173 = vadd.f32 %v673, 1.0
        %v1174 = vadd.f32 %v675, 1.0
        %v1175 = vadd.f32 %v677, 1.0
        %v1176 = vadd.f32 %v679, 1.0
        %v1177 = vadd.f32 %v681, 1.0
        %v1178 = vadd.f32 %v683, 1.0
        %v1179 = vadd.f32 %v685, 1.0
        %v1180 = vadd.f32 %v687, 1.0
        %v1181 = vadd.f32 %v689, 1.0
        %v1182 = vadd.f32 %v691, 1.0
        %v1183 = vadd.f32 %v693, 1.0
        %v1184 = vadd.f32 %v695, 1.0
        %v1185 = vadd.f32 %v697, 1.0
        %v1186 = vadd.f32 %v699, 1.0
        %v1187 = vadd.f32 %v701, 1.0
        %v1188 = vadd.f32 %v703, 1.0
        %v1189 = vadd.f32 %v705, 1.0
        %v1190 = vadd.f32 %v707, 1.0
        %v1191 = vadd.f32 %v709, 1.0
        %v1192 = vadd.f32 %v711, 1.0
        %v1193 = vadd.f32 %v713, 1.0
        %v1194 = vadd.f32 %v715, 1.0
        %v1195 = vadd.f32 %v717, 1.0
        %v1196 = vadd.f32 %v719, 1.0
        %v1197 = vadd.f32 %v721, 1.0
        %v1198 = vadd.f32 %v723, 1.0
        %v1199 = vadd.f32 %v725, 1.0
        %v1200 = vadd.f32 %v727, 1.0
        %v1201 = vadd.f32 %v729, 1.0
        %v1202 = vadd.f32 %v731, 1.0
        %v1203 = vadd.f32 %v733, 1.0
        %v1204 = vadd.f32 %v735, 1.0
        %v1205 = vadd.f32 %v737, 1.0
        %v1206 = vadd.f32 %v739, 1.0
        %v1207 = vadd.f32 %v741, 1.0
        %v1208 = vadd.f32 %v743, 1.0
        %v1209 = vadd.f32 %v745, 1.0
        %v1210 = vadd.f32 %v747, 1.0
        %v1211 = vadd.f32 %v749, 1.0
        %v1212 = vadd.f32 %v751, 1.0
        %v1213 = vadd.f32 %v753, 1.0
        %v1214 = vadd.f32 %v755, 1.0
        %v1215 = vadd.f32 %v757, 1.0
        %v1216 = vadd.f32 %v759, 1.0
        %v1217 = vadd.f32 %v761, 1.0
        %v1218 = vadd.f32 %v763, 1.0
        %v1219 = vadd.f32 %v765, 1.0
        %v1220 = vadd.f32 %v767, 1.0
        %v1221 = vadd.f32 %v769, 1.0
        %v1222 = vadd.f32 %v771, 1.0
        %v1223 = vadd.f32 %v773, 1.0
        %v1224 = vadd.f32 %v775, 1.0
        %v1225 = vadd.f32 %v777, 1.0
        %v1226 = vadd.f32 %v779, 1.0
        %v1227 = vadd.f32 %v781, 1.0
        %v1228 = vadd.f32 %v783, 1.0
        %v1229 = vadd.f32 %v785, 1.0
        %v1230 = vadd.f32 %v787, 1.0
        %v1231 = vadd.f32 %v789, 1.0
        %v1232 = vadd.f32 %v791, 1.0
        %v1233 = vadd.f32 %v793, 1.0
        %v1234 = vadd.f32 %v795, 1.0
        %v1235 = vadd.f32 %v797, 1.0
        %v1236 = vadd.f32 %v799, 1.0
        %v1237 = vadd.f32 %v801, 1.0
        %v1238 = vadd.f32 %v803, 1.0
        %v1239 = vadd.f32 %v805, 1.0
        %v1240 = vadd.f32 %v807, 1.0
        %v1241 = vadd.f32 %v809, 1.0
        %v1242 = vadd.f32 %v811, 1.0
        %v1243 = vadd.f32 %v813, 1.0
        %v1244 = vadd.f32 %v815, 1.0
        %v1245 = vadd.f32 %v817, 1.0
        %v1246 = vadd.f32 %v819, 1.0
        %v1247 = vadd.f32 %v821, 1.0
        %v1248 = vadd.f32 %v823, 1.0
        %v1249 = vadd.f32 %v825, 1.0
        %v1250 = vadd.f32 %v827, 1.0
        %v1251 = vadd.f32 %v829, 1.0
        %v1252 = vadd.f32 %v831, 1.0
        %v1253 = vadd.f32 %v833, 1.0
        %v1254 = vadd.f32 %v835, 1.0
        %v1255 = vadd.f32 %v837, 1.0
        %v1256 = vadd.f32 %v839, 1.0
        %v1257 = vadd.f32 %v841, 1.0
        %v1258 = vadd.f32 %v843, 1.0
        %v1259 = vadd.f32 %v845, 1.0
        %v1260 = vadd.f32 %v847, 1.0
        %v1261 = vadd.f32 %v849, 1.0
        %v1262 = vadd.f32 %v851, 1.0
        %v1263 = vadd.f32 %v853, 1.0
        %v1264 = vadd.f32 %v855, 1.0
        %v1265 = vadd.f32 %v857, 1.0
        %v1266 = vadd.f32 %v859, 1.0
        %v1267 = vadd.f32 %v861, 1.0
        %v1268 = vadd.f32 %v863, 1.0
        %v1269 = vadd.f32 %v865, 1.0
        %v1270 = vadd.f32 %v867, 1.0
        %v1271 = vadd.f32 %v869, 1.0
        %v1272 = vadd.f32 %v871, 1.0
        %v1273 = vadd.f32 %v873, 1.0
        %v1274 = vadd.f32 %v875, 1.0
        %v1275 = vadd.f32 %v877, 1.0
        %v1276 = vadd.f32 %v879, 1.0
        %v1277 = vadd.f32 %v881, 1.0
        %v1278 = vadd.f32 %v883, 1.0
        %v1279 = vadd.f32 %v885, 1.0
        %v1280 = vadd.f32 %v887, 1.0
        %v1281 = vadd.f32 %v889, 1.0
        %v1282 = vadd.f32 %v891, 1.0
        %v1283 = vadd.f32 %v893, 1.0
        %v1284 = vadd.f32 %v895, 1.0
        %v1285 = vadd.f32 %v897, 1.0
        %v1286 = vadd.f32 %v899, 1.0
        %v1287 = vadd.f32 %v901, 1.0
        %v1288 = vadd.f32 %v903, 1.0
        %v1289 = vadd.f32 %v905, 1.0
        %v1290 = vadd.f32 %v907, 1.0
        %v1291 = vadd.f32 %v909, 1.0
        %v1292 = vadd.f32 %v911, 1.0
        %v1293 = vadd.f32 %v913, 1.0
        %v1294 = vadd.f32 %v915, 1.0
        %v1295 = vadd.f32 %v917, 1.0
        %v1296 = vadd.f32 %v919, 1.0
        %v1297 = vadd.f32 %v921, 1.0
        %v1298 = vadd.f32 %v923, 1.0
        %v1299 = vadd.f32 %v925, 1.0
        %v1300 = vadd.f32 %v927, 1.0
        %v1301 = vadd.f32 %v929, 1.0
        %v1302 = vadd.f32 %v931, 1.0
        %v1303 = vadd.f32 %v933, 1.0
        %v1304 = vadd.f32 %v935, 1.0
        %v1305 = vadd.f32 %v937, 1.0
        %v1306 = vadd.f32 %v939, 1.0
        %v1307 = vadd.f32 %v941, 1.0
        %v1308 = vadd.f32 %v943, 1.0
        %v1309 = vadd.f32 %v945, 1.0
        %v1310 = vadd.f32 %v947, 1.0
        %v1311 = vadd.f32 %v949, 1.0
        %v1312 = vadd.f32 %v951, 1.0
        %v1313 = vadd.f32 %v953, 1.0
        %v1314 = vadd.f32 %v955, 1.0
        %v1315 = vadd.f32 %v957, 1.0
        %v1316 = vadd.f32 %v959, 1.0
        %v1317 = vadd.f32 %v961, 1.0
        %v1318 = vadd.f32 %v963, 1.0
        %v1319 = vadd.f32 %v965, 1.0
        %v1320 = vadd.f32 %v967, 1.0
        %v1321 = vadd.f32 %v969, 1.0
        %v1322 = vadd.f32 %v971, 1.0
        %v1323 = vadd.f32 %v973, 1.0
        %v1324 = vadd.f32 %v975, 1.0
        %v1325 = vadd.f32 %v977, 1.0
        %v1326 = vadd.f32 %v979, 1.0
        %v1327 = vadd.f32 %v981, 1.0
        %v1328 = vadd.f32 %v983, 1.0
        %v1329 = vadd.f32 %v985, 1.0
        %v1330 = vadd.f32 %v987, 1.0
        %v1331 = vadd.f32 %v989, 1.0
        %v1332 = vadd.f32 %v991, 1.0
        %v1333 = vadd.f32 %v993, 1.0
        %v1334 = vadd.f32 %v995, 1.0
        %v1335 = vadd.f32 %v997, 1.0
        %v1336 = vadd.f32 %v999, 1.0
        %v1337 = vadd.f32 %v1001, 1.0
        %v1338 = vadd.f32 %v1003, 1.0
        %v1339 = vadd.f32 %v1005, 1.0
        %v1340 = vadd.f32 %v1007, 1.0
        %v1341 = vadd.f32 %v1009, 1.0
        %v1342 = vadd.f32 %v1011, 1.0
        %v1343 = vadd.f32 %v1013, 1.0
        %v1344 = vadd.f32 %v1015, 1.0
        %v1345 = vadd.f32 %v1017, 1.0
        %v1346 = vadd.f32 %v1019, 1.0
        %v1347 = vadd.f32 %v1021, 1.0
        %v1348 = vadd.f32 %v1023, 1.0
        %v1349 = vadd.f32 %v1025, 1.0
        %v1350 = vadd.f32 %v1027, 1.0
        %v1351 = vadd.f32 %v1029, 1.0
        %v1352 = vadd.f32 %v1031, 1.0
        %v1353 = vadd.f32 %v1033, 1.0
        %v1354 = vadd.f32 %v1035, 1.0
        %v1355 = vadd.f32 %v1037, 1.0
        %v1356 = vadd.f32 %v1039, 1.0
        %v1357 = vadd.f32 %v1041, 1.0
        %v1358 = vadd.f32 %v1043, 1.0
        %v1359 = vadd.f32 %v1045, 1.0
        %v1360 = vadd.f32 %v1047, 1.0
        %v1361 = vadd.f32 %v1049, 1.0
        %v1362 = vadd.f32 %v1051, 1.0
        %v1363 = vadd.f32 %v1053, 1.0
        %v1364 = vadd.f32 %v1055, 1.0
        %v1365 = vadd.f32 %v1057, 1.0
        %v1366 = vadd.f32 %v1059, 1.0
        %v1367 = vadd.f32 %v1061, 1.0
        %v1368 = vadd.f32 %v1063, 1.0
        %v1369 = vadd.f32 %v1065, 1.0
        %v1370 = vadd.f32 %v1067, 1.0
        %v1371 = vadd.f32 %v1069, 1.0
        %v1372 = vadd.f32 %v1071, 1.0
        %v1373 = vadd.f32 %v1073, 1.0
        %v1374 = vadd.f32 %v1075, 1.0
        %v1375 = vadd.f32 %v1077, 1.0
        %v1376 = vadd.f32 %v1079, 1.0
        %v1377 = vadd.f32 %v1081, 1.0
        %v1378 = vadd.f32 %v1083, 1.0
        %v1379 = vadd.f32 %v1085, 1.0
        %v1380 = vadd.f32 %v1087, 1.0
        %v1381 = vadd.f32 %v1089, 1.0
        %v1382 = vadd.f32 %v1091, 1.0
        %v1383 = vadd.f32 %v1093, 1.0
        %v1384 = vadd.f32 %v1095, 1.0
        %v1385 = vadd.f32 %v1097, 1.0
        %v1386 = vadd.f32 %v1099, 1.0
        %v1387 = vadd.f32 %v1101, 1.0
        %v1388 = vadd.f32 %v1103, 1.0
        %v1389 = vadd.f32 %v1105, 1.0
        %v1390 = vadd.f32 %v1107, 1.0
        %v1391 = vadd.f32 %v1109, 1.0
        %v1392 = vadd.f32 %v1111, 1.0
        %v1393 = vadd.f32 %v1113, 1.0
        %v1394 = vadd.f32 %v1115, 1.0
        %v1395 = vadd.f32 %v1117, 1.0
        %v1396 = vadd.f32 %v1119, 1.0
        %v1397 = vadd.f32 %v1121, 1.0
        %v1398 = vadd.f32 %v1123, 1.0
        %v1399 = vadd.f32 %v1125, 1.0
        %v1400 = vadd.f32 %v1127, 1.0
        %v1401 = vadd.f32 %v1129, 1.0
        %v1402 = vadd.f32 %v1131, 1.0
        %v1403 = vadd.f32 %v1133, 1.0
        %v1404 = vadd.f32 %v1135, 1.0
        %v1405 = vadd.f32 %v1137, 1.0
        %v1406 = vadd.f32 %v1139, 1.0
        %v1407 = vadd.f32 %v1141, 1.0
        %v1408 = vadd.f32 %v1143, 1.0
        %v1409 = vadd.f32 %v1145, 1.0
        %v1410 = vadd.f32 %v1147, 1.0
        %v1411 = vadd.f32 %v1149, 1.0
        %v1412 = vadd.f32 %v1151, 1.0
        %v1413 = vadd.f32 %v1153, 1.0
        %v1414 = vadd.f32 %v1155, 1.0
        %v1415 = vadd.f32 %v1157, 1.0
        %v1416 = vadd.f32 %v1159, 1.0
        %v1417 = vadd.f32 %v1161, 1.0
        %v1418 = vrcp.pop %v1162
        %v1419 = vmul.f32 1.0, %v1418
        %v1420 = vrcp.pop %v1163
        %v1421 = vmul.f32 1.0, %v1420
        %v1422 = vrcp.pop %v1164
        %v1423 = vmul.f32 1.0, %v1422
        %v1424 = vrcp.pop %v1165
        %v1425 = vmul.f32 1.0, %v1424
        %v1426 = vrcp.pop %v1166
        %v1427 = vmul.f32 1.0, %v1426
        %v1428 = vrcp.pop %v1167
        %v1429 = vmul.f32 1.0, %v1428
        %v1430 = vrcp.pop %v1168
        %v1431 = vmul.f32 1.0, %v1430
        %v1432 = vrcp.pop %v1169
        %v1433 = vmul.f32 1.0, %v1432
        %v1434 = vrcp.pop %v1170
        %v1435 = vmul.f32 1.0, %v1434
        %v1436 = vrcp.pop %v1171
        %v1437 = vmul.f32 1.0, %v1436
        %v1438 = vrcp.pop %v1172
        %v1439 = vmul.f32 1.0, %v1438
        %v1440 = vrcp.pop %v1173
        %v1441 = vmul.f32 1.0, %v1440
        %v1442 = vrcp.pop %v1174
        %v1443 = vmul.f32 1.0, %v1442
        %v1444 = vrcp.pop %v1175
        %v1445 = vmul.f32 1.0, %v1444
        %v1446 = vrcp.pop %v1176
        %v1447 = vmul.f32 1.0, %v1446
        %v1448 = vrcp.pop %v1177
        %v1449 = vmul.f32 1.0, %v1448
        %v1450 = vrcp.pop %v1178
        %v1451 = vmul.f32 1.0, %v1450
        %v1452 = vrcp.pop %v1179
        %v1453 = vmul.f32 1.0, %v1452
        %v1454 = vrcp.pop %v1180
        %v1455 = vmul.f32 1.0, %v1454
        %v1456 = vrcp.pop %v1181
        %v1457 = vmul.f32 1.0, %v1456
        %v1458 = vrcp.pop %v1182
        %v1459 = vmul.f32 1.0, %v1458
        %v1460 = vrcp.pop %v1183
        %v1461 = vmul.f32 1.0, %v1460
        %v1462 = vrcp.pop %v1184
        %v1463 = vmul.f32 1.0, %v1462
        %v1464 = vrcp.pop %v1185
        %v1465 = vmul.f32 1.0, %v1464
        %v1466 = vrcp.pop %v1186
        %v1467 = vmul.f32 1.0, %v1466
        %v1468 = vrcp.pop %v1187
        %v1469 = vmul.f32 1.0, %v1468
        %v1470 = vrcp.pop %v1188
        %v1471 = vmul.f32 1.0, %v1470
        %v1472 = vrcp.pop %v1189
        %v1473 = vmul.f32 1.0, %v1472
        %v1474 = vrcp.pop %v1190
        %v1475 = vmul.f32 1.0, %v1474
        %v1476 = vrcp.pop %v1191
        %v1477 = vmul.f32 1.0, %v1476
        %v1478 = vrcp.pop %v1192
        %v1479 = vmul.f32 1.0, %v1478
        %v1480 = vrcp.pop %v1193
        %v1481 = vmul.f32 1.0, %v1480
        %v1482 = vrcp.pop %v1194
        %v1483 = vmul.f32 1.0, %v1482
        %v1484 = vrcp.pop %v1195
        %v1485 = vmul.f32 1.0, %v1484
        %v1486 = vrcp.pop %v1196
        %v1487 = vmul.f32 1.0, %v1486
        %v1488 = vrcp.pop %v1197
        %v1489 = vmul.f32 1.0, %v1488
        %v1490 = vrcp.pop %v1198
        %v1491 = vmul.f32 1.0, %v1490
        %v1492 = vrcp.pop %v1199
        %v1493 = vmul.f32 1.0, %v1492
        %v1494 = vrcp.pop %v1200
        %v1495 = vmul.f32 1.0, %v1494
        %v1496 = vrcp.pop %v1201
        %v1497 = vmul.f32 1.0, %v1496
        %v1498 = vrcp.pop %v1202
        %v1499 = vmul.f32 1.0, %v1498
        %v1500 = vrcp.pop %v1203
        %v1501 = vmul.f32 1.0, %v1500
        %v1502 = vrcp.pop %v1204
        %v1503 = vmul.f32 1.0, %v1502
        %v1504 = vrcp.pop %v1205
        %v1505 = vmul.f32 1.0, %v1504
        %v1506 = vrcp.pop %v1206
        %v1507 = vmul.f32 1.0, %v1506
        %v1508 = vrcp.pop %v1207
        %v1509 = vmul.f32 1.0, %v1508
        %v1510 = vrcp.pop %v1208
        %v1511 = vmul.f32 1.0, %v1510
        %v1512 = vrcp.pop %v1209
        %v1513 = vmul.f32 1.0, %v1512
        %v1514 = vrcp.pop %v1210
        %v1515 = vmul.f32 1.0, %v1514
        %v1516 = vrcp.pop %v1211
        %v1517 = vmul.f32 1.0, %v1516
        %v1518 = vrcp.pop %v1212
        %v1519 = vmul.f32 1.0, %v1518
        %v1520 = vrcp.pop %v1213
        %v1521 = vmul.f32 1.0, %v1520
        %v1522 = vrcp.pop %v1214
        %v1523 = vmul.f32 1.0, %v1522
        %v1524 = vrcp.pop %v1215
        %v1525 = vmul.f32 1.0, %v1524
        %v1526 = vrcp.pop %v1216
        %v1527 = vmul.f32 1.0, %v1526
        %v1528 = vrcp.pop %v1217
        %v1529 = vmul.f32 1.0, %v1528
        %v1530 = vrcp.pop %v1218
        %v1531 = vmul.f32 1.0, %v1530
        %v1532 = vrcp.pop %v1219
        %v1533 = vmul.f32 1.0, %v1532
        %v1534 = vrcp.pop %v1220
        %v1535 = vmul.f32 1.0, %v1534
        %v1536 = vrcp.pop %v1221
        %v1537 = vmul.f32 1.0, %v1536
        %v1538 = vrcp.pop %v1222
        %v1539 = vmul.f32 1.0, %v1538
        %v1540 = vrcp.pop %v1223
        %v1541 = vmul.f32 1.0, %v1540
        %v1542 = vrcp.pop %v1224
        %v1543 = vmul.f32 1.0, %v1542
        %v1544 = vrcp.pop %v1225
        %v1545 = vmul.f32 1.0, %v1544
        %v1546 = vrcp.pop %v1226
        %v1547 = vmul.f32 1.0, %v1546
        %v1548 = vrcp.pop %v1227
        %v1549 = vmul.f32 1.0, %v1548
        %v1550 = vrcp.pop %v1228
        %v1551 = vmul.f32 1.0, %v1550
        %v1552 = vrcp.pop %v1229
        %v1553 = vmul.f32 1.0, %v1552
        %v1554 = vrcp.pop %v1230
        %v1555 = vmul.f32 1.0, %v1554
        %v1556 = vrcp.pop %v1231
        %v1557 = vmul.f32 1.0, %v1556
        %v1558 = vrcp.pop %v1232
        %v1559 = vmul.f32 1.0, %v1558
        %v1560 = vrcp.pop %v1233
        %v1561 = vmul.f32 1.0, %v1560
        %v1562 = vrcp.pop %v1234
        %v1563 = vmul.f32 1.0, %v1562
        %v1564 = vrcp.pop %v1235
        %v1565 = vmul.f32 1.0, %v1564
        %v1566 = vrcp.pop %v1236
        %v1567 = vmul.f32 1.0, %v1566
        %v1568 = vrcp.pop %v1237
        %v1569 = vmul.f32 1.0, %v1568
        %v1570 = vrcp.pop %v1238
        %v1571 = vmul.f32 1.0, %v1570
        %v1572 = vrcp.pop %v1239
        %v1573 = vmul.f32 1.0, %v1572
        %v1574 = vrcp.pop %v1240
        %v1575 = vmul.f32 1.0, %v1574
        %v1576 = vrcp.pop %v1241
        %v1577 = vmul.f32 1.0, %v1576
        %v1578 = vrcp.pop %v1242
        %v1579 = vmul.f32 1.0, %v1578
        %v1580 = vrcp.pop %v1243
        %v1581 = vmul.f32 1.0, %v1580
        %v1582 = vrcp.pop %v1244
        %v1583 = vmul.f32 1.0, %v1582
        %v1584 = vrcp.pop %v1245
        %v1585 = vmul.f32 1.0, %v1584
        %v1586 = vrcp.pop %v1246
        %v1587 = vmul.f32 1.0, %v1586
        %v1588 = vrcp.pop %v1247
        %v1589 = vmul.f32 1.0, %v1588
        %v1590 = vrcp.pop %v1248
        %v1591 = vmul.f32 1.0, %v1590
        %v1592 = vrcp.pop %v1249
        %v1593 = vmul.f32 1.0, %v1592
        %v1594 = vrcp.pop %v1250
        %v1595 = vmul.f32 1.0, %v1594
        %v1596 = vrcp.pop %v1251
        %v1597 = vmul.f32 1.0, %v1596
        %v1598 = vrcp.pop %v1252
        %v1599 = vmul.f32 1.0, %v1598
        %v1600 = vrcp.pop %v1253
        %v1601 = vmul.f32 1.0, %v1600
        %v1602 = vrcp.pop %v1254
        %v1603 = vmul.f32 1.0, %v1602
        %v1604 = vrcp.pop %v1255
        %v1605 = vmul.f32 1.0, %v1604
        %v1606 = vrcp.pop %v1256
        %v1607 = vmul.f32 1.0, %v1606
        %v1608 = vrcp.pop %v1257
        %v1609 = vmul.f32 1.0, %v1608
        %v1610 = vrcp.pop %v1258
        %v1611 = vmul.f32 1.0, %v1610
        %v1612 = vrcp.pop %v1259
        %v1613 = vmul.f32 1.0, %v1612
        %v1614 = vrcp.pop %v1260
        %v1615 = vmul.f32 1.0, %v1614
        %v1616 = vrcp.pop %v1261
        %v1617 = vmul.f32 1.0, %v1616
        %v1618 = vrcp.pop %v1262
        %v1619 = vmul.f32 1.0, %v1618
        %v1620 = vrcp.pop %v1263
        %v1621 = vmul.f32 1.0, %v1620
        %v1622 = vrcp.pop %v1264
        %v1623 = vmul.f32 1.0, %v1622
        %v1624 = vrcp.pop %v1265
        %v1625 = vmul.f32 1.0, %v1624
        %v1626 = vrcp.pop %v1266
        %v1627 = vmul.f32 1.0, %v1626
        %v1628 = vrcp.pop %v1267
        %v1629 = vmul.f32 1.0, %v1628
        %v1630 = vrcp.pop %v1268
        %v1631 = vmul.f32 1.0, %v1630
        %v1632 = vrcp.pop %v1269
        %v1633 = vmul.f32 1.0, %v1632
        %v1634 = vrcp.pop %v1270
        %v1635 = vmul.f32 1.0, %v1634
        %v1636 = vrcp.pop %v1271
        %v1637 = vmul.f32 1.0, %v1636
        %v1638 = vrcp.pop %v1272
        %v1639 = vmul.f32 1.0, %v1638
        %v1640 = vrcp.pop %v1273
        %v1641 = vmul.f32 1.0, %v1640
        %v1642 = vrcp.pop %v1274
        %v1643 = vmul.f32 1.0, %v1642
        %v1644 = vrcp.pop %v1275
        %v1645 = vmul.f32 1.0, %v1644
        %v1646 = vrcp.pop %v1276
        %v1647 = vmul.f32 1.0, %v1646
        %v1648 = vrcp.pop %v1277
        %v1649 = vmul.f32 1.0, %v1648
        %v1650 = vrcp.pop %v1278
        %v1651 = vmul.f32 1.0, %v1650
        %v1652 = vrcp.pop %v1279
        %v1653 = vmul.f32 1.0, %v1652
        %v1654 = vrcp.pop %v1280
        %v1655 = vmul.f32 1.0, %v1654
        %v1656 = vrcp.pop %v1281
        %v1657 = vmul.f32 1.0, %v1656
        %v1658 = vrcp.pop %v1282
        %v1659 = vmul.f32 1.0, %v1658
        %v1660 = vrcp.pop %v1283
        %v1661 = vmul.f32 1.0, %v1660
        %v1662 = vrcp.pop %v1284
        %v1663 = vmul.f32 1.0, %v1662
        %v1664 = vrcp.pop %v1285
        %v1665 = vmul.f32 1.0, %v1664
        %v1666 = vrcp.pop %v1286
        %v1667 = vmul.f32 1.0, %v1666
        %v1668 = vrcp.pop %v1287
        %v1669 = vmul.f32 1.0, %v1668
        %v1670 = vrcp.pop %v1288
        %v1671 = vmul.f32 1.0, %v1670
        %v1672 = vrcp.pop %v1289
        %v1673 = vmul.f32 1.0, %v1672
        %v1674 = vrcp.pop %v1290
        %v1675 = vmul.f32 1.0, %v1674
        %v1676 = vrcp.pop %v1291
        %v1677 = vmul.f32 1.0, %v1676
        %v1678 = vrcp.pop %v1292
        %v1679 = vmul.f32 1.0, %v1678
        %v1680 = vrcp.pop %v1293
        %v1681 = vmul.f32 1.0, %v1680
        %v1682 = vrcp.pop %v1294
        %v1683 = vmul.f32 1.0, %v1682
        %v1684 = vrcp.pop %v1295
        %v1685 = vmul.f32 1.0, %v1684
        %v1686 = vrcp.pop %v1296
        %v1687 = vmul.f32 1.0, %v1686
        %v1688 = vrcp.pop %v1297
        %v1689 = vmul.f32 1.0, %v1688
        %v1690 = vrcp.pop %v1298
        %v1691 = vmul.f32 1.0, %v1690
        %v1692 = vrcp.pop %v1299
        %v1693 = vmul.f32 1.0, %v1692
        %v1694 = vrcp.pop %v1300
        %v1695 = vmul.f32 1.0, %v1694
        %v1696 = vrcp.pop %v1301
        %v1697 = vmul.f32 1.0, %v1696
        %v1698 = vrcp.pop %v1302
        %v1699 = vmul.f32 1.0, %v1698
        %v1700 = vrcp.pop %v1303
        %v1701 = vmul.f32 1.0, %v1700
        %v1702 = vrcp.pop %v1304
        %v1703 = vmul.f32 1.0, %v1702
        %v1704 = vrcp.pop %v1305
        %v1705 = vmul.f32 1.0, %v1704
        %v1706 = vrcp.pop %v1306
        %v1707 = vmul.f32 1.0, %v1706
        %v1708 = vrcp.pop %v1307
        %v1709 = vmul.f32 1.0, %v1708
        %v1710 = vrcp.pop %v1308
        %v1711 = vmul.f32 1.0, %v1710
        %v1712 = vrcp.pop %v1309
        %v1713 = vmul.f32 1.0, %v1712
        %v1714 = vrcp.pop %v1310
        %v1715 = vmul.f32 1.0, %v1714
        %v1716 = vrcp.pop %v1311
        %v1717 = vmul.f32 1.0, %v1716
        %v1718 = vrcp.pop %v1312
        %v1719 = vmul.f32 1.0, %v1718
        %v1720 = vrcp.pop %v1313
        %v1721 = vmul.f32 1.0, %v1720
        %v1722 = vrcp.pop %v1314
        %v1723 = vmul.f32 1.0, %v1722
        %v1724 = vrcp.pop %v1315
        %v1725 = vmul.f32 1.0, %v1724
        %v1726 = vrcp.pop %v1316
        %v1727 = vmul.f32 1.0, %v1726
        %v1728 = vrcp.pop %v1317
        %v1729 = vmul.f32 1.0, %v1728
        %v1730 = vrcp.pop %v1318
        %v1731 = vmul.f32 1.0, %v1730
        %v1732 = vrcp.pop %v1319
        %v1733 = vmul.f32 1.0, %v1732
        %v1734 = vrcp.pop %v1320
        %v1735 = vmul.f32 1.0, %v1734
        %v1736 = vrcp.pop %v1321
        %v1737 = vmul.f32 1.0, %v1736
        %v1738 = vrcp.pop %v1322
        %v1739 = vmul.f32 1.0, %v1738
        %v1740 = vrcp.pop %v1323
        %v1741 = vmul.f32 1.0, %v1740
        %v1742 = vrcp.pop %v1324
        %v1743 = vmul.f32 1.0, %v1742
        %v1744 = vrcp.pop %v1325
        %v1745 = vmul.f32 1.0, %v1744
        %v1746 = vrcp.pop %v1326
        %v1747 = vmul.f32 1.0, %v1746
        %v1748 = vrcp.pop %v1327
        %v1749 = vmul.f32 1.0, %v1748
        %v1750 = vrcp.pop %v1328
        %v1751 = vmul.f32 1.0, %v1750
        %v1752 = vrcp.pop %v1329
        %v1753 = vmul.f32 1.0, %v1752
        %v1754 = vrcp.pop %v1330
        %v1755 = vmul.f32 1.0, %v1754
        %v1756 = vrcp.pop %v1331
        %v1757 = vmul.f32 1.0, %v1756
        %v1758 = vrcp.pop %v1332
        %v1759 = vmul.f32 1.0, %v1758
        %v1760 = vrcp.pop %v1333
        %v1761 = vmul.f32 1.0, %v1760
        %v1762 = vrcp.pop %v1334
        %v1763 = vmul.f32 1.0, %v1762
        %v1764 = vrcp.pop %v1335
        %v1765 = vmul.f32 1.0, %v1764
        %v1766 = vrcp.pop %v1336
        %v1767 = vmul.f32 1.0, %v1766
        %v1768 = vrcp.pop %v1337
        %v1769 = vmul.f32 1.0, %v1768
        %v1770 = vrcp.pop %v1338
        %v1771 = vmul.f32 1.0, %v1770
        %v1772 = vrcp.pop %v1339
        %v1773 = vmul.f32 1.0, %v1772
        %v1774 = vrcp.pop %v1340
        %v1775 = vmul.f32 1.0, %v1774
        %v1776 = vrcp.pop %v1341
        %v1777 = vmul.f32 1.0, %v1776
        %v1778 = vrcp.pop %v1342
        %v1779 = vmul.f32 1.0, %v1778
        %v1780 = vrcp.pop %v1343
        %v1781 = vmul.f32 1.0, %v1780
        %v1782 = vrcp.pop %v1344
        %v1783 = vmul.f32 1.0, %v1782
        %v1784 = vrcp.pop %v1345
        %v1785 = vmul.f32 1.0, %v1784
        %v1786 = vrcp.pop %v1346
        %v1787 = vmul.f32 1.0, %v1786
        %v1788 = vrcp.pop %v1347
        %v1789 = vmul.f32 1.0, %v1788
        %v1790 = vrcp.pop %v1348
        %v1791 = vmul.f32 1.0, %v1790
        %v1792 = vrcp.pop %v1349
        %v1793 = vmul.f32 1.0, %v1792
        %v1794 = vrcp.pop %v1350
        %v1795 = vmul.f32 1.0, %v1794
        %v1796 = vrcp.pop %v1351
        %v1797 = vmul.f32 1.0, %v1796
        %v1798 = vrcp.pop %v1352
        %v1799 = vmul.f32 1.0, %v1798
        %v1800 = vrcp.pop %v1353
        %v1801 = vmul.f32 1.0, %v1800
        %v1802 = vrcp.pop %v1354
        %v1803 = vmul.f32 1.0, %v1802
        %v1804 = vrcp.pop %v1355
        %v1805 = vmul.f32 1.0, %v1804
        %v1806 = vrcp.pop %v1356
        %v1807 = vmul.f32 1.0, %v1806
        %v1808 = vrcp.pop %v1357
        %v1809 = vmul.f32 1.0, %v1808
        %v1810 = vrcp.pop %v1358
        %v1811 = vmul.f32 1.0, %v1810
        %v1812 = vrcp.pop %v1359
        %v1813 = vmul.f32 1.0, %v1812
        %v1814 = vrcp.pop %v1360
        %v1815 = vmul.f32 1.0, %v1814
        %v1816 = vrcp.pop %v1361
        %v1817 = vmul.f32 1.0, %v1816
        %v1818 = vrcp.pop %v1362
        %v1819 = vmul.f32 1.0, %v1818
        %v1820 = vrcp.pop %v1363
        %v1821 = vmul.f32 1.0, %v1820
        %v1822 = vrcp.pop %v1364
        %v1823 = vmul.f32 1.0, %v1822
        %v1824 = vrcp.pop %v1365
        %v1825 = vmul.f32 1.0, %v1824
        %v1826 = vrcp.pop %v1366
        %v1827 = vmul.f32 1.0, %v1826
        %v1828 = vrcp.pop %v1367
        %v1829 = vmul.f32 1.0, %v1828
        %v1830 = vrcp.pop %v1368
        %v1831 = vmul.f32 1.0, %v1830
        %v1832 = vrcp.pop %v1369
        %v1833 = vmul.f32 1.0, %v1832
        %v1834 = vrcp.pop %v1370
        %v1835 = vmul.f32 1.0, %v1834
        %v1836 = vrcp.pop %v1371
        %v1837 = vmul.f32 1.0, %v1836
        %v1838 = vrcp.pop %v1372
        %v1839 = vmul.f32 1.0, %v1838
        %v1840 = vrcp.pop %v1373
        %v1841 = vmul.f32 1.0, %v1840
        %v1842 = vrcp.pop %v1374
        %v1843 = vmul.f32 1.0, %v1842
        %v1844 = vrcp.pop %v1375
        %v1845 = vmul.f32 1.0, %v1844
        %v1846 = vrcp.pop %v1376
        %v1847 = vmul.f32 1.0, %v1846
        %v1848 = vrcp.pop %v1377
        %v1849 = vmul.f32 1.0, %v1848
        %v1850 = vrcp.pop %v1378
        %v1851 = vmul.f32 1.0, %v1850
        %v1852 = vrcp.pop %v1379
        %v1853 = vmul.f32 1.0, %v1852
        %v1854 = vrcp.pop %v1380
        %v1855 = vmul.f32 1.0, %v1854
        %v1856 = vrcp.pop %v1381
        %v1857 = vmul.f32 1.0, %v1856
        %v1858 = vrcp.pop %v1382
        %v1859 = vmul.f32 1.0, %v1858
        %v1860 = vrcp.pop %v1383
        %v1861 = vmul.f32 1.0, %v1860
        %v1862 = vrcp.pop %v1384
        %v1863 = vmul.f32 1.0, %v1862
        %v1864 = vrcp.pop %v1385
        %v1865 = vmul.f32 1.0, %v1864
        %v1866 = vrcp.pop %v1386
        %v1867 = vmul.f32 1.0, %v1866
        %v1868 = vrcp.pop %v1387
        %v1869 = vmul.f32 1.0, %v1868
        %v1870 = vrcp.pop %v1388
        %v1871 = vmul.f32 1.0, %v1870
        %v1872 = vrcp.pop %v1389
        %v1873 = vmul.f32 1.0, %v1872
        %v1874 = vrcp.pop %v1390
        %v1875 = vmul.f32 1.0, %v1874
        %v1876 = vrcp.pop %v1391
        %v1877 = vmul.f32 1.0, %v1876
        %v1878 = vrcp.pop %v1392
        %v1879 = vmul.f32 1.0, %v1878
        %v1880 = vrcp.pop %v1393
        %v1881 = vmul.f32 1.0, %v1880
        %v1882 = vrcp.pop %v1394
        %v1883 = vmul.f32 1.0, %v1882
        %v1884 = vrcp.pop %v1395
        %v1885 = vmul.f32 1.0, %v1884
        %v1886 = vrcp.pop %v1396
        %v1887 = vmul.f32 1.0, %v1886
        %v1888 = vrcp.pop %v1397
        %v1889 = vmul.f32 1.0, %v1888
        %v1890 = vrcp.pop %v1398
        %v1891 = vmul.f32 1.0, %v1890
        %v1892 = vrcp.pop %v1399
        %v1893 = vmul.f32 1.0, %v1892
        %v1894 = vrcp.pop %v1400
        %v1895 = vmul.f32 1.0, %v1894
        %v1896 = vrcp.pop %v1401
        %v1897 = vmul.f32 1.0, %v1896
        %v1898 = vrcp.pop %v1402
        %v1899 = vmul.f32 1.0, %v1898
        %v1900 = vrcp.pop %v1403
        %v1901 = vmul.f32 1.0, %v1900
        %v1902 = vrcp.pop %v1404
        %v1903 = vmul.f32 1.0, %v1902
        %v1904 = vrcp.pop %v1405
        %v1905 = vmul.f32 1.0, %v1904
        %v1906 = vrcp.pop %v1406
        %v1907 = vmul.f32 1.0, %v1906
        %v1908 = vrcp.pop %v1407
        %v1909 = vmul.f32 1.0, %v1908
        %v1910 = vrcp.pop %v1408
        %v1911 = vmul.f32 1.0, %v1910
        %v1912 = vrcp.pop %v1409
        %v1913 = vmul.f32 1.0, %v1912
        %v1914 = vrcp.pop %v1410
        %v1915 = vmul.f32 1.0, %v1914
        %v1916 = vrcp.pop %v1411
        %v1917 = vmul.f32 1.0, %v1916
        %v1918 = vrcp.pop %v1412
        %v1919 = vmul.f32 1.0, %v1918
        %v1920 = vrcp.pop %v1413
        %v1921 = vmul.f32 1.0, %v1920
        %v1922 = vrcp.pop %v1414
        %v1923 = vmul.f32 1.0, %v1922
        %v1924 = vrcp.pop %v1415
        %v1925 = vmul.f32 1.0, %v1924
        %v1926 = vrcp.pop %v1416
        %v1927 = vmul.f32 1.0, %v1926
        %v1928 = vrcp.pop %v1417
        %v1929 = vmul.f32 1.0, %v1928
        %v1930 = vmul.f32 %v1419, 2.0
        %v1931 = vmul.f32 %v1421, 2.0
        %v1932 = vmul.f32 %v1423, 2.0
        %v1933 = vmul.f32 %v1425, 2.0
        %v1934 = vmul.f32 %v1427, 2.0
        %v1935 = vmul.f32 %v1429, 2.0
        %v1936 = vmul.f32 %v1431, 2.0
        %v1937 = vmul.f32 %v1433, 2.0
        %v1938 = vmul.f32 %v1435, 2.0
        %v1939 = vmul.f32 %v1437, 2.0
        %v1940 = vmul.f32 %v1439, 2.0
        %v1941 = vmul.f32 %v1441, 2.0
        %v1942 = vmul.f32 %v1443, 2.0
        %v1943 = vmul.f32 %v1445, 2.0
        %v1944 = vmul.f32 %v1447, 2.0
        %v1945 = vmul.f32 %v1449, 2.0
        %v1946 = vmul.f32 %v1451, 2.0
        %v1947 = vmul.f32 %v1453, 2.0
        %v1948 = vmul.f32 %v1455, 2.0
        %v1949 = vmul.f32 %v1457, 2.0
        %v1950 = vmul.f32 %v1459, 2.0
        %v1951 = vmul.f32 %v1461, 2.0
        %v1952 = vmul.f32 %v1463, 2.0
        %v1953 = vmul.f32 %v1465, 2.0
        %v1954 = vmul.f32 %v1467, 2.0
        %v1955 = vmul.f32 %v1469, 2.0
        %v1956 = vmul.f32 %v1471, 2.0
        %v1957 = vmul.f32 %v1473, 2.0
        %v1958 = vmul.f32 %v1475, 2.0
        %v1959 = vmul.f32 %v1477, 2.0
        %v1960 = vmul.f32 %v1479, 2.0
        %v1961 = vmul.f32 %v1481, 2.0
        %v1962 = vmul.f32 %v1483, 2.0
        %v1963 = vmul.f32 %v1485, 2.0
        %v1964 = vmul.f32 %v1487, 2.0
        %v1965 = vmul.f32 %v1489, 2.0
        %v1966 = vmul.f32 %v1491, 2.0
        %v1967 = vmul.f32 %v1493, 2.0
        %v1968 = vmul.f32 %v1495, 2.0
        %v1969 = vmul.f32 %v1497, 2.0
        %v1970 = vmul.f32 %v1499, 2.0
        %v1971 = vmul.f32 %v1501, 2.0
        %v1972 = vmul.f32 %v1503, 2.0
        %v1973 = vmul.f32 %v1505, 2.0
        %v1974 = vmul.f32 %v1507, 2.0
        %v1975 = vmul.f32 %v1509, 2.0
        %v1976 = vmul.f32 %v1511, 2.0
        %v1977 = vmul.f32 %v1513, 2.0
        %v1978 = vmul.f32 %v1515, 2.0
        %v1979 = vmul.f32 %v1517, 2.0
        %v1980 = vmul.f32 %v1519, 2.0
        %v1981 = vmul.f32 %v1521, 2.0
        %v1982 = vmul.f32 %v1523, 2.0
        %v1983 = vmul.f32 %v1525, 2.0
        %v1984 = vmul.f32 %v1527, 2.0
        %v1985 = vmul.f32 %v1529, 2.0
        %v1986 = vmul.f32 %v1531, 2.0
        %v1987 = vmul.f32 %v1533, 2.0
        %v1988 = vmul.f32 %v1535, 2.0
        %v1989 = vmul.f32 %v1537, 2.0
        %v1990 = vmul.f32 %v1539, 2.0
        %v1991 = vmul.f32 %v1541, 2.0
        %v1992 = vmul.f32 %v1543, 2.0
        %v1993 = vmul.f32 %v1545, 2.0
        %v1994 = vmul.f32 %v1547, 2.0
        %v1995 = vmul.f32 %v1549, 2.0
        %v1996 = vmul.f32 %v1551, 2.0
        %v1997 = vmul.f32 %v1553, 2.0
        %v1998 = vmul.f32 %v1555, 2.0
        %v1999 = vmul.f32 %v1557, 2.0
        %v2000 = vmul.f32 %v1559, 2.0
        %v2001 = vmul.f32 %v1561, 2.0
        %v2002 = vmul.f32 %v1563, 2.0
        %v2003 = vmul.f32 %v1565, 2.0
        %v2004 = vmul.f32 %v1567, 2.0
        %v2005 = vmul.f32 %v1569, 2.0
        %v2006 = vmul.f32 %v1571, 2.0
        %v2007 = vmul.f32 %v1573, 2.0
        %v2008 = vmul.f32 %v1575, 2.0
        %v2009 = vmul.f32 %v1577, 2.0
        %v2010 = vmul.f32 %v1579, 2.0
        %v2011 = vmul.f32 %v1581, 2.0
        %v2012 = vmul.f32 %v1583, 2.0
        %v2013 = vmul.f32 %v1585, 2.0
        %v2014 = vmul.f32 %v1587, 2.0
        %v2015 = vmul.f32 %v1589, 2.0
        %v2016 = vmul.f32 %v1591, 2.0
        %v2017 = vmul.f32 %v1593, 2.0
        %v2018 = vmul.f32 %v1595, 2.0
        %v2019 = vmul.f32 %v1597, 2.0
        %v2020 = vmul.f32 %v1599, 2.0
        %v2021 = vmul.f32 %v1601, 2.0
        %v2022 = vmul.f32 %v1603, 2.0
        %v2023 = vmul.f32 %v1605, 2.0
        %v2024 = vmul.f32 %v1607, 2.0
        %v2025 = vmul.f32 %v1609, 2.0
        %v2026 = vmul.f32 %v1611, 2.0
        %v2027 = vmul.f32 %v1613, 2.0
        %v2028 = vmul.f32 %v1615, 2.0
        %v2029 = vmul.f32 %v1617, 2.0
        %v2030 = vmul.f32 %v1619, 2.0
        %v2031 = vmul.f32 %v1621, 2.0
        %v2032 = vmul.f32 %v1623, 2.0
        %v2033 = vmul.f32 %v1625, 2.0
        %v2034 = vmul.f32 %v1627, 2.0
        %v2035 = vmul.f32 %v1629, 2.0
        %v2036 = vmul.f32 %v1631, 2.0
        %v2037 = vmul.f32 %v1633, 2.0
        %v2038 = vmul.f32 %v1635, 2.0
        %v2039 = vmul.f32 %v1637, 2.0
        %v2040 = vmul.f32 %v1639, 2.0
        %v2041 = vmul.f32 %v1641, 2.0
        %v2042 = vmul.f32 %v1643, 2.0
        %v2043 = vmul.f32 %v1645, 2.0
        %v2044 = vmul.f32 %v1647, 2.0
        %v2045 = vmul.f32 %v1649, 2.0
        %v2046 = vmul.f32 %v1651, 2.0
        %v2047 = vmul.f32 %v1653, 2.0
        %v2048 = vmul.f32 %v1655, 2.0
        %v2049 = vmul.f32 %v1657, 2.0
        %v2050 = vmul.f32 %v1659, 2.0
        %v2051 = vmul.f32 %v1661, 2.0
        %v2052 = vmul.f32 %v1663, 2.0
        %v2053 = vmul.f32 %v1665, 2.0
        %v2054 = vmul.f32 %v1667, 2.0
        %v2055 = vmul.f32 %v1669, 2.0
        %v2056 = vmul.f32 %v1671, 2.0
        %v2057 = vmul.f32 %v1673, 2.0
        %v2058 = vmul.f32 %v1675, 2.0
        %v2059 = vmul.f32 %v1677, 2.0
        %v2060 = vmul.f32 %v1679, 2.0
        %v2061 = vmul.f32 %v1681, 2.0
        %v2062 = vmul.f32 %v1683, 2.0
        %v2063 = vmul.f32 %v1685, 2.0
        %v2064 = vmul.f32 %v1687, 2.0
        %v2065 = vmul.f32 %v1689, 2.0
        %v2066 = vmul.f32 %v1691, 2.0
        %v2067 = vmul.f32 %v1693, 2.0
        %v2068 = vmul.f32 %v1695, 2.0
        %v2069 = vmul.f32 %v1697, 2.0
        %v2070 = vmul.f32 %v1699, 2.0
        %v2071 = vmul.f32 %v1701, 2.0
        %v2072 = vmul.f32 %v1703, 2.0
        %v2073 = vmul.f32 %v1705, 2.0
        %v2074 = vmul.f32 %v1707, 2.0
        %v2075 = vmul.f32 %v1709, 2.0
        %v2076 = vmul.f32 %v1711, 2.0
        %v2077 = vmul.f32 %v1713, 2.0
        %v2078 = vmul.f32 %v1715, 2.0
        %v2079 = vmul.f32 %v1717, 2.0
        %v2080 = vmul.f32 %v1719, 2.0
        %v2081 = vmul.f32 %v1721, 2.0
        %v2082 = vmul.f32 %v1723, 2.0
        %v2083 = vmul.f32 %v1725, 2.0
        %v2084 = vmul.f32 %v1727, 2.0
        %v2085 = vmul.f32 %v1729, 2.0
        %v2086 = vmul.f32 %v1731, 2.0
        %v2087 = vmul.f32 %v1733, 2.0
        %v2088 = vmul.f32 %v1735, 2.0
        %v2089 = vmul.f32 %v1737, 2.0
        %v2090 = vmul.f32 %v1739, 2.0
        %v2091 = vmul.f32 %v1741, 2.0
        %v2092 = vmul.f32 %v1743, 2.0
        %v2093 = vmul.f32 %v1745, 2.0
        %v2094 = vmul.f32 %v1747, 2.0
        %v2095 = vmul.f32 %v1749, 2.0
        %v2096 = vmul.f32 %v1751, 2.0
        %v2097 = vmul.f32 %v1753, 2.0
        %v2098 = vmul.f32 %v1755, 2.0
        %v2099 = vmul.f32 %v1757, 2.0
        %v2100 = vmul.f32 %v1759, 2.0
        %v2101 = vmul.f32 %v1761, 2.0
        %v2102 = vmul.f32 %v1763, 2.0
        %v2103 = vmul.f32 %v1765, 2.0
        %v2104 = vmul.f32 %v1767, 2.0
        %v2105 = vmul.f32 %v1769, 2.0
        %v2106 = vmul.f32 %v1771, 2.0
        %v2107 = vmul.f32 %v1773, 2.0
        %v2108 = vmul.f32 %v1775, 2.0
        %v2109 = vmul.f32 %v1777, 2.0
        %v2110 = vmul.f32 %v1779, 2.0
        %v2111 = vmul.f32 %v1781, 2.0
        %v2112 = vmul.f32 %v1783, 2.0
        %v2113 = vmul.f32 %v1785, 2.0
        %v2114 = vmul.f32 %v1787, 2.0
        %v2115 = vmul.f32 %v1789, 2.0
        %v2116 = vmul.f32 %v1791, 2.0
        %v2117 = vmul.f32 %v1793, 2.0
        %v2118 = vmul.f32 %v1795, 2.0
        %v2119 = vmul.f32 %v1797, 2.0
        %v2120 = vmul.f32 %v1799, 2.0
        %v2121 = vmul.f32 %v1801, 2.0
        %v2122 = vmul.f32 %v1803, 2.0
        %v2123 = vmul.f32 %v1805, 2.0
        %v2124 = vmul.f32 %v1807, 2.0
        %v2125 = vmul.f32 %v1809, 2.0
        %v2126 = vmul.f32 %v1811, 2.0
        %v2127 = vmul.f32 %v1813, 2.0
        %v2128 = vmul.f32 %v1815, 2.0
        %v2129 = vmul.f32 %v1817, 2.0
        %v2130 = vmul.f32 %v1819, 2.0
        %v2131 = vmul.f32 %v1821, 2.0
        %v2132 = vmul.f32 %v1823, 2.0
        %v2133 = vmul.f32 %v1825, 2.0
        %v2134 = vmul.f32 %v1827, 2.0
        %v2135 = vmul.f32 %v1829, 2.0
        %v2136 = vmul.f32 %v1831, 2.0
        %v2137 = vmul.f32 %v1833, 2.0
        %v2138 = vmul.f32 %v1835, 2.0
        %v2139 = vmul.f32 %v1837, 2.0
        %v2140 = vmul.f32 %v1839, 2.0
        %v2141 = vmul.f32 %v1841, 2.0
        %v2142 = vmul.f32 %v1843, 2.0
        %v2143 = vmul.f32 %v1845, 2.0
        %v2144 = vmul.f32 %v1847, 2.0
        %v2145 = vmul.f32 %v1849, 2.0
        %v2146 = vmul.f32 %v1851, 2.0
        %v2147 = vmul.f32 %v1853, 2.0
        %v2148 = vmul.f32 %v1855, 2.0
        %v2149 = vmul.f32 %v1857, 2.0
        %v2150 = vmul.f32 %v1859, 2.0
        %v2151 = vmul.f32 %v1861, 2.0
        %v2152 = vmul.f32 %v1863, 2.0
        %v2153 = vmul.f32 %v1865, 2.0
        %v2154 = vmul.f32 %v1867, 2.0
        %v2155 = vmul.f32 %v1869, 2.0
        %v2156 = vmul.f32 %v1871, 2.0
        %v2157 = vmul.f32 %v1873, 2.0
        %v2158 = vmul.f32 %v1875, 2.0
        %v2159 = vmul.f32 %v1877, 2.0
        %v2160 = vmul.f32 %v1879, 2.0
        %v2161 = vmul.f32 %v1881, 2.0
        %v2162 = vmul.f32 %v1883, 2.0
        %v2163 = vmul.f32 %v1885, 2.0
        %v2164 = vmul.f32 %v1887, 2.0
        %v2165 = vmul.f32 %v1889, 2.0
        %v2166 = vmul.f32 %v1891, 2.0
        %v2167 = vmul.f32 %v1893, 2.0
        %v2168 = vmul.f32 %v1895, 2.0
        %v2169 = vmul.f32 %v1897, 2.0
        %v2170 = vmul.f32 %v1899, 2.0
        %v2171 = vmul.f32 %v1901, 2.0
        %v2172 = vmul.f32 %v1903, 2.0
        %v2173 = vmul.f32 %v1905, 2.0
        %v2174 = vmul.f32 %v1907, 2.0
        %v2175 = vmul.f32 %v1909, 2.0
        %v2176 = vmul.f32 %v1911, 2.0
        %v2177 = vmul.f32 %v1913, 2.0
        %v2178 = vmul.f32 %v1915, 2.0
        %v2179 = vmul.f32 %v1917, 2.0
        %v2180 = vmul.f32 %v1919, 2.0
        %v2181 = vmul.f32 %v1921, 2.0
        %v2182 = vmul.f32 %v1923, 2.0
        %v2183 = vmul.f32 %v1925, 2.0
        %v2184 = vmul.f32 %v1927, 2.0
        %v2185 = vmul.f32 %v1929, 2.0
        %v2186 = vsub.f32 %v1930, 1.0
        %v2187 = vsub.f32 %v1931, 1.0
        %v2188 = vsub.f32 %v1932, 1.0
        %v2189 = vsub.f32 %v1933, 1.0
        %v2190 = vsub.f32 %v1934, 1.0
        %v2191 = vsub.f32 %v1935, 1.0
        %v2192 = vsub.f32 %v1936, 1.0
        %v2193 = vsub.f32 %v1937, 1.0
        %v2194 = vsub.f32 %v1938, 1.0
        %v2195 = vsub.f32 %v1939, 1.0
        %v2196 = vsub.f32 %v1940, 1.0
        %v2197 = vsub.f32 %v1941, 1.0
        %v2198 = vsub.f32 %v1942, 1.0
        %v2199 = vsub.f32 %v1943, 1.0
        %v2200 = vsub.f32 %v1944, 1.0
        %v2201 = vsub.f32 %v1945, 1.0
        %v2202 = vsub.f32 %v1946, 1.0
        %v2203 = vsub.f32 %v1947, 1.0
        %v2204 = vsub.f32 %v1948, 1.0
        %v2205 = vsub.f32 %v1949, 1.0
        %v2206 = vsub.f32 %v1950, 1.0
        %v2207 = vsub.f32 %v1951, 1.0
        %v2208 = vsub.f32 %v1952, 1.0
        %v2209 = vsub.f32 %v1953, 1.0
        %v2210 = vsub.f32 %v1954, 1.0
        %v2211 = vsub.f32 %v1955, 1.0
        %v2212 = vsub.f32 %v1956, 1.0
        %v2213 = vsub.f32 %v1957, 1.0
        %v2214 = vsub.f32 %v1958, 1.0
        %v2215 = vsub.f32 %v1959, 1.0
        %v2216 = vsub.f32 %v1960, 1.0
        %v2217 = vsub.f32 %v1961, 1.0
        %v2218 = vsub.f32 %v1962, 1.0
        %v2219 = vsub.f32 %v1963, 1.0
        %v2220 = vsub.f32 %v1964, 1.0
        %v2221 = vsub.f32 %v1965, 1.0
        %v2222 = vsub.f32 %v1966, 1.0
        %v2223 = vsub.f32 %v1967, 1.0
        %v2224 = vsub.f32 %v1968, 1.0
        %v2225 = vsub.f32 %v1969, 1.0
        %v2226 = vsub.f32 %v1970, 1.0
        %v2227 = vsub.f32 %v1971, 1.0
        %v2228 = vsub.f32 %v1972, 1.0
        %v2229 = vsub.f32 %v1973, 1.0
        %v2230 = vsub.f32 %v1974, 1.0
        %v2231 = vsub.f32 %v1975, 1.0
        %v2232 = vsub.f32 %v1976, 1.0
        %v2233 = vsub.f32 %v1977, 1.0
        %v2234 = vsub.f32 %v1978, 1.0
        %v2235 = vsub.f32 %v1979, 1.0
        %v2236 = vsub.f32 %v1980, 1.0
        %v2237 = vsub.f32 %v1981, 1.0
        %v2238 = vsub.f32 %v1982, 1.0
        %v2239 = vsub.f32 %v1983, 1.0
        %v2240 = vsub.f32 %v1984, 1.0
        %v2241 = vsub.f32 %v1985, 1.0
        %v2242 = vsub.f32 %v1986, 1.0
        %v2243 = vsub.f32 %v1987, 1.0
        %v2244 = vsub.f32 %v1988, 1.0
        %v2245 = vsub.f32 %v1989, 1.0
        %v2246 = vsub.f32 %v1990, 1.0
        %v2247 = vsub.f32 %v1991, 1.0
        %v2248 = vsub.f32 %v1992, 1.0
        %v2249 = vsub.f32 %v1993, 1.0
        %v2250 = vsub.f32 %v1994, 1.0
        %v2251 = vsub.f32 %v1995, 1.0
        %v2252 = vsub.f32 %v1996, 1.0
        %v2253 = vsub.f32 %v1997, 1.0
        %v2254 = vsub.f32 %v1998, 1.0
        %v2255 = vsub.f32 %v1999, 1.0
        %v2256 = vsub.f32 %v2000, 1.0
        %v2257 = vsub.f32 %v2001, 1.0
        %v2258 = vsub.f32 %v2002, 1.0
        %v2259 = vsub.f32 %v2003, 1.0
        %v2260 = vsub.f32 %v2004, 1.0
        %v2261 = vsub.f32 %v2005, 1.0
        %v2262 = vsub.f32 %v2006, 1.0
        %v2263 = vsub.f32 %v2007, 1.0
        %v2264 = vsub.f32 %v2008, 1.0
        %v2265 = vsub.f32 %v2009, 1.0
        %v2266 = vsub.f32 %v2010, 1.0
        %v2267 = vsub.f32 %v2011, 1.0
        %v2268 = vsub.f32 %v2012, 1.0
        %v2269 = vsub.f32 %v2013, 1.0
        %v2270 = vsub.f32 %v2014, 1.0
        %v2271 = vsub.f32 %v2015, 1.0
        %v2272 = vsub.f32 %v2016, 1.0
        %v2273 = vsub.f32 %v2017, 1.0
        %v2274 = vsub.f32 %v2018, 1.0
        %v2275 = vsub.f32 %v2019, 1.0
        %v2276 = vsub.f32 %v2020, 1.0
        %v2277 = vsub.f32 %v2021, 1.0
        %v2278 = vsub.f32 %v2022, 1.0
        %v2279 = vsub.f32 %v2023, 1.0
        %v2280 = vsub.f32 %v2024, 1.0
        %v2281 = vsub.f32 %v2025, 1.0
        %v2282 = vsub.f32 %v2026, 1.0
        %v2283 = vsub.f32 %v2027, 1.0
        %v2284 = vsub.f32 %v2028, 1.0
        %v2285 = vsub.f32 %v2029, 1.0
        %v2286 = vsub.f32 %v2030, 1.0
        %v2287 = vsub.f32 %v2031, 1.0
        %v2288 = vsub.f32 %v2032, 1.0
        %v2289 = vsub.f32 %v2033, 1.0
        %v2290 = vsub.f32 %v2034, 1.0
        %v2291 = vsub.f32 %v2035, 1.0
        %v2292 = vsub.f32 %v2036, 1.0
        %v2293 = vsub.f32 %v2037, 1.0
        %v2294 = vsub.f32 %v2038, 1.0
        %v2295 = vsub.f32 %v2039, 1.0
        %v2296 = vsub.f32 %v2040, 1.0
        %v2297 = vsub.f32 %v2041, 1.0
        %v2298 = vsub.f32 %v2042, 1.0
        %v2299 = vsub.f32 %v2043, 1.0
        %v2300 = vsub.f32 %v2044, 1.0
        %v2301 = vsub.f32 %v2045, 1.0
        %v2302 = vsub.f32 %v2046, 1.0
        %v2303 = vsub.f32 %v2047, 1.0
        %v2304 = vsub.f32 %v2048, 1.0
        %v2305 = vsub.f32 %v2049, 1.0
        %v2306 = vsub.f32 %v2050, 1.0
        %v2307 = vsub.f32 %v2051, 1.0
        %v2308 = vsub.f32 %v2052, 1.0
        %v2309 = vsub.f32 %v2053, 1.0
        %v2310 = vsub.f32 %v2054, 1.0
        %v2311 = vsub.f32 %v2055, 1.0
        %v2312 = vsub.f32 %v2056, 1.0
        %v2313 = vsub.f32 %v2057, 1.0
        %v2314 = vsub.f32 %v2058, 1.0
        %v2315 = vsub.f32 %v2059, 1.0
        %v2316 = vsub.f32 %v2060, 1.0
        %v2317 = vsub.f32 %v2061, 1.0
        %v2318 = vsub.f32 %v2062, 1.0
        %v2319 = vsub.f32 %v2063, 1.0
        %v2320 = vsub.f32 %v2064, 1.0
        %v2321 = vsub.f32 %v2065, 1.0
        %v2322 = vsub.f32 %v2066, 1.0
        %v2323 = vsub.f32 %v2067, 1.0
        %v2324 = vsub.f32 %v2068, 1.0
        %v2325 = vsub.f32 %v2069, 1.0
        %v2326 = vsub.f32 %v2070, 1.0
        %v2327 = vsub.f32 %v2071, 1.0
        %v2328 = vsub.f32 %v2072, 1.0
        %v2329 = vsub.f32 %v2073, 1.0
        %v2330 = vsub.f32 %v2074, 1.0
        %v2331 = vsub.f32 %v2075, 1.0
        %v2332 = vsub.f32 %v2076, 1.0
        %v2333 = vsub.f32 %v2077, 1.0
        %v2334 = vsub.f32 %v2078, 1.0
        %v2335 = vsub.f32 %v2079, 1.0
        %v2336 = vsub.f32 %v2080, 1.0
        %v2337 = vsub.f32 %v2081, 1.0
        %v2338 = vsub.f32 %v2082, 1.0
        %v2339 = vsub.f32 %v2083, 1.0
        %v2340 = vsub.f32 %v2084, 1.0
        %v2341 = vsub.f32 %v2085, 1.0
        %v2342 = vsub.f32 %v2086, 1.0
        %v2343 = vsub.f32 %v2087, 1.0
        %v2344 = vsub.f32 %v2088, 1.0
        %v2345 = vsub.f32 %v2089, 1.0
        %v2346 = vsub.f32 %v2090, 1.0
        %v2347 = vsub.f32 %v2091, 1.0
        %v2348 = vsub.f32 %v2092, 1.0
        %v2349 = vsub.f32 %v2093, 1.0
        %v2350 = vsub.f32 %v2094, 1.0
        %v2351 = vsub.f32 %v2095, 1.0
        %v2352 = vsub.f32 %v2096, 1.0
        %v2353 = vsub.f32 %v2097, 1.0
        %v2354 = vsub.f32 %v2098, 1.0
        %v2355 = vsub.f32 %v2099, 1.0
        %v2356 = vsub.f32 %v2100, 1.0
        %v2357 = vsub.f32 %v2101, 1.0
        %v2358 = vsub.f32 %v2102, 1.0
        %v2359 = vsub.f32 %v2103, 1.0
        %v2360 = vsub.f32 %v2104, 1.0
        %v2361 = vsub.f32 %v2105, 1.0
        %v2362 = vsub.f32 %v2106, 1.0
        %v2363 = vsub.f32 %v2107, 1.0
        %v2364 = vsub.f32 %v2108, 1.0
        %v2365 = vsub.f32 %v2109, 1.0
        %v2366 = vsub.f32 %v2110, 1.0
        %v2367 = vsub.f32 %v2111, 1.0
        %v2368 = vsub.f32 %v2112, 1.0
        %v2369 = vsub.f32 %v2113, 1.0
        %v2370 = vsub.f32 %v2114, 1.0
        %v2371 = vsub.f32 %v2115, 1.0
        %v2372 = vsub.f32 %v2116, 1.0
        %v2373 = vsub.f32 %v2117, 1.0
        %v2374 = vsub.f32 %v2118, 1.0
        %v2375 = vsub.f32 %v2119, 1.0
        %v2376 = vsub.f32 %v2120, 1.0
        %v2377 = vsub.f32 %v2121, 1.0
        %v2378 = vsub.f32 %v2122, 1.0
        %v2379 = vsub.f32 %v2123, 1.0
        %v2380 = vsub.f32 %v2124, 1.0
        %v2381 = vsub.f32 %v2125, 1.0
        %v2382 = vsub.f32 %v2126, 1.0
        %v2383 = vsub.f32 %v2127, 1.0
        %v2384 = vsub.f32 %v2128, 1.0
        %v2385 = vsub.f32 %v2129, 1.0
        %v2386 = vsub.f32 %v2130, 1.0
        %v2387 = vsub.f32 %v2131, 1.0
        %v2388 = vsub.f32 %v2132, 1.0
        %v2389 = vsub.f32 %v2133, 1.0
        %v2390 = vsub.f32 %v2134, 1.0
        %v2391 = vsub.f32 %v2135, 1.0
        %v2392 = vsub.f32 %v2136, 1.0
        %v2393 = vsub.f32 %v2137, 1.0
        %v2394 = vsub.f32 %v2138, 1.0
        %v2395 = vsub.f32 %v2139, 1.0
        %v2396 = vsub.f32 %v2140, 1.0
        %v2397 = vsub.f32 %v2141, 1.0
        %v2398 = vsub.f32 %v2142, 1.0
        %v2399 = vsub.f32 %v2143, 1.0
        %v2400 = vsub.f32 %v2144, 1.0
        %v2401 = vsub.f32 %v2145, 1.0
        %v2402 = vsub.f32 %v2146, 1.0
        %v2403 = vsub.f32 %v2147, 1.0
        %v2404 = vsub.f32 %v2148, 1.0
        %v2405 = vsub.f32 %v2149, 1.0
        %v2406 = vsub.f32 %v2150, 1.0
        %v2407 = vsub.f32 %v2151, 1.0
        %v2408 = vsub.f32 %v2152, 1.0
        %v2409 = vsub.f32 %v2153, 1.0
        %v2410 = vsub.f32 %v2154, 1.0
        %v2411 = vsub.f32 %v2155, 1.0
        %v2412 = vsub.f32 %v2156, 1.0
        %v2413 = vsub.f32 %v2157, 1.0
        %v2414 = vsub.f32 %v2158, 1.0
        %v2415 = vsub.f32 %v2159, 1.0
        %v2416 = vsub.f32 %v2160, 1.0
        %v2417 = vsub.f32 %v2161, 1.0
        %v2418 = vsub.f32 %v2162, 1.0
        %v2419 = vsub.f32 %v2163, 1.0
        %v2420 = vsub.f32 %v2164, 1.0
        %v2421 = vsub.f32 %v2165, 1.0
        %v2422 = vsub.f32 %v2166, 1.0
        %v2423 = vsub.f32 %v2167, 1.0
        %v2424 = vsub.f32 %v2168, 1.0
        %v2425 = vsub.f32 %v2169, 1.0
        %v2426 = vsub.f32 %v2170, 1.0
        %v2427 = vsub.f32 %v2171, 1.0
        %v2428 = vsub.f32 %v2172, 1.0
        %v2429 = vsub.f32 %v2173, 1.0
        %v2430 = vsub.f32 %v2174, 1.0
        %v2431 = vsub.f32 %v2175, 1.0
        %v2432 = vsub.f32 %v2176, 1.0
        %v2433 = vsub.f32 %v2177, 1.0
        %v2434 = vsub.f32 %v2178, 1.0
        %v2435 = vsub.f32 %v2179, 1.0
        %v2436 = vsub.f32 %v2180, 1.0
        %v2437 = vsub.f32 %v2181, 1.0
        %v2438 = vsub.f32 %v2182, 1.0
        %v2439 = vsub.f32 %v2183, 1.0
        %v2440 = vsub.f32 %v2184, 1.0
        %v2441 = vsub.f32 %v2185, 1.0
        %2442 = vst [vmem:[%s135] sm:$0xff] %v2186
        %2443 = vst [vmem:[%s135 + $0x8] sm:$0xff] %v2187
        %2444 = vst [vmem:[%s135 + $0x10] sm:$0xff] %v2188
        %2445 = vst [vmem:[%s135 + $0x18] sm:$0xff] %v2189
        %2446 = vst [vmem:[%s135 + $0x20] sm:$0xff] %v2190
        %2447 = vst [vmem:[%s135 + $0x28] sm:$0xff] %v2191
        %2448 = vst [vmem:[%s135 + $0x30] sm:$0xff] %v2192
        %2449 = vst [vmem:[%s135 + $0x38] sm:$0xff] %v2193
        %2450 = vst [vmem:[%s135 + $0x40] sm:$0xff] %v2194
        %2451 = vst [vmem:[%s135 + $0x48] sm:$0xff] %v2195
        %2452 = vst [vmem:[%s135 + $0x50] sm:$0xff] %v2196
        %2453 = vst [vmem:[%s135 + $0x58] sm:$0xff] %v2197
        %2454 = vst [vmem:[%s135 + $0x60] sm:$0xff] %v2198
        %2455 = vst [vmem:[%s135 + $0x68] sm:$0xff] %v2199
        %2456 = vst [vmem:[%s135 + $0x70] sm:$0xff] %v2200
        %2457 = vst [vmem:[%s135 + $0x78] sm:$0xff] %v2201
        %2458 = vst [vmem:[%s135 + $0x80] sm:$0xff] %v2202
        %2459 = vst [vmem:[%s135 + $0x88] sm:$0xff] %v2203
        %2460 = vst [vmem:[%s135 + $0x90] sm:$0xff] %v2204
        %2461 = vst [vmem:[%s135 + $0x98] sm:$0xff] %v2205
        %2462 = vst [vmem:[%s135 + $0xa0] sm:$0xff] %v2206
        %2463 = vst [vmem:[%s135 + $0xa8] sm:$0xff] %v2207
        %2464 = vst [vmem:[%s135 + $0xb0] sm:$0xff] %v2208
        %2465 = vst [vmem:[%s135 + $0xb8] sm:$0xff] %v2209
        %2466 = vst [vmem:[%s135 + $0xc0] sm:$0xff] %v2210
        %2467 = vst [vmem:[%s135 + $0xc8] sm:$0xff] %v2211
        %2468 = vst [vmem:[%s135 + $0xd0] sm:$0xff] %v2212
        %2469 = vst [vmem:[%s135 + $0xd8] sm:$0xff] %v2213
        %2470 = vst [vmem:[%s135 + $0xe0] sm:$0xff] %v2214
        %2471 = vst [vmem:[%s135 + $0xe8] sm:$0xff] %v2215
        %2472 = vst [vmem:[%s135 + $0xf0] sm:$0xff] %v2216
        %2473 = vst [vmem:[%s135 + $0xf8] sm:$0xff] %v2217
        %2474 = vst [vmem:[%s135 + $0x100] sm:$0xff] %v2218
        %2475 = vst [vmem:[%s135 + $0x108] sm:$0xff] %v2219
        %2476 = vst [vmem:[%s135 + $0x110] sm:$0xff] %v2220
        %2477 = vst [vmem:[%s135 + $0x118] sm:$0xff] %v2221
        %2478 = vst [vmem:[%s135 + $0x120] sm:$0xff] %v2222
        %2479 = vst [vmem:[%s135 + $0x128] sm:$0xff] %v2223
        %2480 = vst [vmem:[%s135 + $0x130] sm:$0xff] %v2224
        %2481 = vst [vmem:[%s135 + $0x138] sm:$0xff] %v2225
        %2482 = vst [vmem:[%s135 + $0x140] sm:$0xff] %v2226
        %2483 = vst [vmem:[%s135 + $0x148] sm:$0xff] %v2227
        %2484 = vst [vmem:[%s135 + $0x150] sm:$0xff] %v2228
        %2485 = vst [vmem:[%s135 + $0x158] sm:$0xff] %v2229
        %2486 = vst [vmem:[%s135 + $0x160] sm:$0xff] %v2230
        %2487 = vst [vmem:[%s135 + $0x168] sm:$0xff] %v2231
        %2488 = vst [vmem:[%s135 + $0x170] sm:$0xff] %v2232
        %2489 = vst [vmem:[%s135 + $0x178] sm:$0xff] %v2233
        %2490 = vst [vmem:[%s135 + $0x180] sm:$0xff] %v2234
        %2491 = vst [vmem:[%s135 + $0x188] sm:$0xff] %v2235
        %2492 = vst [vmem:[%s135 + $0x190] sm:$0xff] %v2236
        %2493 = vst [vmem:[%s135 + $0x198] sm:$0xff] %v2237
        %2494 = vst [vmem:[%s135 + $0x1a0] sm:$0xff] %v2238
        %2495 = vst [vmem:[%s135 + $0x1a8] sm:$0xff] %v2239
        %2496 = vst [vmem:[%s135 + $0x1b0] sm:$0xff] %v2240
        %2497 = vst [vmem:[%s135 + $0x1b8] sm:$0xff] %v2241
        %2498 = vst [vmem:[%s135 + $0x1c0] sm:$0xff] %v2242
        %2499 = vst [vmem:[%s135 + $0x1c8] sm:$0xff] %v2243
        %2500 = vst [vmem:[%s135 + $0x1d0] sm:$0xff] %v2244
        %2501 = vst [vmem:[%s135 + $0x1d8] sm:$0xff] %v2245
        %2502 = vst [vmem:[%s135 + $0x1e0] sm:$0xff] %v2246
        %2503 = vst [vmem:[%s135 + $0x1e8] sm:$0xff] %v2247
        %2504 = vst [vmem:[%s135 + $0x1f0] sm:$0xff] %v2248
        %2505 = vst [vmem:[%s135 + $0x1f8] sm:$0xff] %v2249
        %2506 = vst [vmem:[%s135 + $0x200] sm:$0xff] %v2250
        %2507 = vst [vmem:[%s135 + $0x208] sm:$0xff] %v2251
        %2508 = vst [vmem:[%s135 + $0x210] sm:$0xff] %v2252
        %2509 = vst [vmem:[%s135 + $0x218] sm:$0xff] %v2253
        %2510 = vst [vmem:[%s135 + $0x220] sm:$0xff] %v2254
        %2511 = vst [vmem:[%s135 + $0x228] sm:$0xff] %v2255
        %2512 = vst [vmem:[%s135 + $0x230] sm:$0xff] %v2256
        %2513 = vst [vmem:[%s135 + $0x238] sm:$0xff] %v2257
        %2514 = vst [vmem:[%s135 + $0x240] sm:$0xff] %v2258
        %2515 = vst [vmem:[%s135 + $0x248] sm:$0xff] %v2259
        %2516 = vst [vmem:[%s135 + $0x250] sm:$0xff] %v2260
        %2517 = vst [vmem:[%s135 + $0x258] sm:$0xff] %v2261
        %2518 = vst [vmem:[%s135 + $0x260] sm:$0xff] %v2262
        %2519 = vst [vmem:[%s135 + $0x268] sm:$0xff] %v2263
        %2520 = vst [vmem:[%s135 + $0x270] sm:$0xff] %v2264
        %2521 = vst [vmem:[%s135 + $0x278] sm:$0xff] %v2265
        %2522 = vst [vmem:[%s135 + $0x280] sm:$0xff] %v2266
        %2523 = vst [vmem:[%s135 + $0x288] sm:$0xff] %v2267
        %2524 = vst [vmem:[%s135 + $0x290] sm:$0xff] %v2268
        %2525 = vst [vmem:[%s135 + $0x298] sm:$0xff] %v2269
        %2526 = vst [vmem:[%s135 + $0x2a0] sm:$0xff] %v2270
        %2527 = vst [vmem:[%s135 + $0x2a8] sm:$0xff] %v2271
        %2528 = vst [vmem:[%s135 + $0x2b0] sm:$0xff] %v2272
        %2529 = vst [vmem:[%s135 + $0x2b8] sm:$0xff] %v2273
        %2530 = vst [vmem:[%s135 + $0x2c0] sm:$0xff] %v2274
        %2531 = vst [vmem:[%s135 + $0x2c8] sm:$0xff] %v2275
        %2532 = vst [vmem:[%s135 + $0x2d0] sm:$0xff] %v2276
        %2533 = vst [vmem:[%s135 + $0x2d8] sm:$0xff] %v2277
        %2534 = vst [vmem:[%s135 + $0x2e0] sm:$0xff] %v2278
        %2535 = vst [vmem:[%s135 + $0x2e8] sm:$0xff] %v2279
        %2536 = vst [vmem:[%s135 + $0x2f0] sm:$0xff] %v2280
        %2537 = vst [vmem:[%s135 + $0x2f8] sm:$0xff] %v2281
        %2538 = vst [vmem:[%s135 + $0x300] sm:$0xff] %v2282
        %2539 = vst [vmem:[%s135 + $0x308] sm:$0xff] %v2283
        %2540 = vst [vmem:[%s135 + $0x310] sm:$0xff] %v2284
        %2541 = vst [vmem:[%s135 + $0x318] sm:$0xff] %v2285
        %2542 = vst [vmem:[%s135 + $0x320] sm:$0xff] %v2286
        %2543 = vst [vmem:[%s135 + $0x328] sm:$0xff] %v2287
        %2544 = vst [vmem:[%s135 + $0x330] sm:$0xff] %v2288
        %2545 = vst [vmem:[%s135 + $0x338] sm:$0xff] %v2289
        %2546 = vst [vmem:[%s135 + $0x340] sm:$0xff] %v2290
        %2547 = vst [vmem:[%s135 + $0x348] sm:$0xff] %v2291
        %2548 = vst [vmem:[%s135 + $0x350] sm:$0xff] %v2292
        %2549 = vst [vmem:[%s135 + $0x358] sm:$0xff] %v2293
        %2550 = vst [vmem:[%s135 + $0x360] sm:$0xff] %v2294
        %2551 = vst [vmem:[%s135 + $0x368] sm:$0xff] %v2295
        %2552 = vst [vmem:[%s135 + $0x370] sm:$0xff] %v2296
        %2553 = vst [vmem:[%s135 + $0x378] sm:$0xff] %v2297
        %2554 = vst [vmem:[%s135 + $0x380] sm:$0xff] %v2298
        %2555 = vst [vmem:[%s135 + $0x388] sm:$0xff] %v2299
        %2556 = vst [vmem:[%s135 + $0x390] sm:$0xff] %v2300
        %2557 = vst [vmem:[%s135 + $0x398] sm:$0xff] %v2301
        %2558 = vst [vmem:[%s135 + $0x3a0] sm:$0xff] %v2302
        %2559 = vst [vmem:[%s135 + $0x3a8] sm:$0xff] %v2303
        %2560 = vst [vmem:[%s135 + $0x3b0] sm:$0xff] %v2304
        %2561 = vst [vmem:[%s135 + $0x3b8] sm:$0xff] %v2305
        %2562 = vst [vmem:[%s135 + $0x3c0] sm:$0xff] %v2306
        %2563 = vst [vmem:[%s135 + $0x3c8] sm:$0xff] %v2307
        %2564 = vst [vmem:[%s135 + $0x3d0] sm:$0xff] %v2308
        %2565 = vst [vmem:[%s135 + $0x3d8] sm:$0xff] %v2309
        %2566 = vst [vmem:[%s135 + $0x3e0] sm:$0xff] %v2310
        %2567 = vst [vmem:[%s135 + $0x3e8] sm:$0xff] %v2311
        %2568 = vst [vmem:[%s135 + $0x3f0] sm:$0xff] %v2312
        %2569 = vst [vmem:[%s135 + $0x3f8] sm:$0xff] %v2313
        %2570 = vst [vmem:[%s135 + $0x400] sm:$0xff] %v2314
        %2571 = vst [vmem:[%s135 + $0x408] sm:$0xff] %v2315
        %2572 = vst [vmem:[%s135 + $0x410] sm:$0xff] %v2316
        %2573 = vst [vmem:[%s135 + $0x418] sm:$0xff] %v2317
        %2574 = vst [vmem:[%s135 + $0x420] sm:$0xff] %v2318
        %2575 = vst [vmem:[%s135 + $0x428] sm:$0xff] %v2319
        %2576 = vst [vmem:[%s135 + $0x430] sm:$0xff] %v2320
        %2577 = vst [vmem:[%s135 + $0x438] sm:$0xff] %v2321
        %2578 = vst [vmem:[%s135 + $0x440] sm:$0xff] %v2322
        %2579 = vst [vmem:[%s135 + $0x448] sm:$0xff] %v2323
        %2580 = vst [vmem:[%s135 + $0x450] sm:$0xff] %v2324
        %2581 = vst [vmem:[%s135 + $0x458] sm:$0xff] %v2325
        %2582 = vst [vmem:[%s135 + $0x460] sm:$0xff] %v2326
        %2583 = vst [vmem:[%s135 + $0x468] sm:$0xff] %v2327
        %2584 = vst [vmem:[%s135 + $0x470] sm:$0xff] %v2328
        %2585 = vst [vmem:[%s135 + $0x478] sm:$0xff] %v2329
        %2586 = vst [vmem:[%s135 + $0x480] sm:$0xff] %v2330
        %2587 = vst [vmem:[%s135 + $0x488] sm:$0xff] %v2331
        %2588 = vst [vmem:[%s135 + $0x490] sm:$0xff] %v2332
        %2589 = vst [vmem:[%s135 + $0x498] sm:$0xff] %v2333
        %2590 = vst [vmem:[%s135 + $0x4a0] sm:$0xff] %v2334
        %2591 = vst [vmem:[%s135 + $0x4a8] sm:$0xff] %v2335
        %2592 = vst [vmem:[%s135 + $0x4b0] sm:$0xff] %v2336
        %2593 = vst [vmem:[%s135 + $0x4b8] sm:$0xff] %v2337
        %2594 = vst [vmem:[%s135 + $0x4c0] sm:$0xff] %v2338
        %2595 = vst [vmem:[%s135 + $0x4c8] sm:$0xff] %v2339
        %2596 = vst [vmem:[%s135 + $0x4d0] sm:$0xff] %v2340
        %2597 = vst [vmem:[%s135 + $0x4d8] sm:$0xff] %v2341
        %2598 = vst [vmem:[%s135 + $0x4e0] sm:$0xff] %v2342
        %2599 = vst [vmem:[%s135 + $0x4e8] sm:$0xff] %v2343
        %2600 = vst [vmem:[%s135 + $0x4f0] sm:$0xff] %v2344
        %2601 = vst [vmem:[%s135 + $0x4f8] sm:$0xff] %v2345
        %2602 = vst [vmem:[%s135 + $0x500] sm:$0xff] %v2346
        %2603 = vst [vmem:[%s135 + $0x508] sm:$0xff] %v2347
        %2604 = vst [vmem:[%s135 + $0x510] sm:$0xff] %v2348
        %2605 = vst [vmem:[%s135 + $0x518] sm:$0xff] %v2349
        %2606 = vst [vmem:[%s135 + $0x520] sm:$0xff] %v2350
        %2607 = vst [vmem:[%s135 + $0x528] sm:$0xff] %v2351
        %2608 = vst [vmem:[%s135 + $0x530] sm:$0xff] %v2352
        %2609 = vst [vmem:[%s135 + $0x538] sm:$0xff] %v2353
        %2610 = vst [vmem:[%s135 + $0x540] sm:$0xff] %v2354
        %2611 = vst [vmem:[%s135 + $0x548] sm:$0xff] %v2355
        %2612 = vst [vmem:[%s135 + $0x550] sm:$0xff] %v2356
        %2613 = vst [vmem:[%s135 + $0x558] sm:$0xff] %v2357
        %2614 = vst [vmem:[%s135 + $0x560] sm:$0xff] %v2358
        %2615 = vst [vmem:[%s135 + $0x568] sm:$0xff] %v2359
        %2616 = vst [vmem:[%s135 + $0x570] sm:$0xff] %v2360
        %2617 = vst [vmem:[%s135 + $0x578] sm:$0xff] %v2361
        %2618 = vst [vmem:[%s135 + $0x580] sm:$0xff] %v2362
        %2619 = vst [vmem:[%s135 + $0x588] sm:$0xff] %v2363
        %2620 = vst [vmem:[%s135 + $0x590] sm:$0xff] %v2364
        %2621 = vst [vmem:[%s135 + $0x598] sm:$0xff] %v2365
        %2622 = vst [vmem:[%s135 + $0x5a0] sm:$0xff] %v2366
        %2623 = vst [vmem:[%s135 + $0x5a8] sm:$0xff] %v2367
        %2624 = vst [vmem:[%s135 + $0x5b0] sm:$0xff] %v2368
        %2625 = vst [vmem:[%s135 + $0x5b8] sm:$0xff] %v2369
        %2626 = vst [vmem:[%s135 + $0x5c0] sm:$0xff] %v2370
        %2627 = vst [vmem:[%s135 + $0x5c8] sm:$0xff] %v2371
        %2628 = vst [vmem:[%s135 + $0x5d0] sm:$0xff] %v2372
        %2629 = vst [vmem:[%s135 + $0x5d8] sm:$0xff] %v2373
        %2630 = vst [vmem:[%s135 + $0x5e0] sm:$0xff] %v2374
        %2631 = vst [vmem:[%s135 + $0x5e8] sm:$0xff] %v2375
        %2632 = vst [vmem:[%s135 + $0x5f0] sm:$0xff] %v2376
        %2633 = vst [vmem:[%s135 + $0x5f8] sm:$0xff] %v2377
        %2634 = vst [vmem:[%s135 + $0x600] sm:$0xff] %v2378
        %2635 = vst [vmem:[%s135 + $0x608] sm:$0xff] %v2379
        %2636 = vst [vmem:[%s135 + $0x610] sm:$0xff] %v2380
        %2637 = vst [vmem:[%s135 + $0x618] sm:$0xff] %v2381
        %2638 = vst [vmem:[%s135 + $0x620] sm:$0xff] %v2382
        %2639 = vst [vmem:[%s135 + $0x628] sm:$0xff] %v2383
        %2640 = vst [vmem:[%s135 + $0x630] sm:$0xff] %v2384
        %2641 = vst [vmem:[%s135 + $0x638] sm:$0xff] %v2385
        %2642 = vst [vmem:[%s135 + $0x640] sm:$0xff] %v2386
        %2643 = vst [vmem:[%s135 + $0x648] sm:$0xff] %v2387
        %2644 = vst [vmem:[%s135 + $0x650] sm:$0xff] %v2388
        %2645 = vst [vmem:[%s135 + $0x658] sm:$0xff] %v2389
        %2646 = vst [vmem:[%s135 + $0x660] sm:$0xff] %v2390
        %2647 = vst [vmem:[%s135 + $0x668] sm:$0xff] %v2391
        %2648 = vst [vmem:[%s135 + $0x670] sm:$0xff] %v2392
        %2649 = vst [vmem:[%s135 + $0x678] sm:$0xff] %v2393
        %2650 = vst [vmem:[%s135 + $0x680] sm:$0xff] %v2394
        %2651 = vst [vmem:[%s135 + $0x688] sm:$0xff] %v2395
        %2652 = vst [vmem:[%s135 + $0x690] sm:$0xff] %v2396
        %2653 = vst [vmem:[%s135 + $0x698] sm:$0xff] %v2397
        %2654 = vst [vmem:[%s135 + $0x6a0] sm:$0xff] %v2398
        %2655 = vst [vmem:[%s135 + $0x6a8] sm:$0xff] %v2399
        %2656 = vst [vmem:[%s135 + $0x6b0] sm:$0xff] %v2400
        %2657 = vst [vmem:[%s135 + $0x6b8] sm:$0xff] %v2401
        %2658 = vst [vmem:[%s135 + $0x6c0] sm:$0xff] %v2402
        %2659 = vst [vmem:[%s135 + $0x6c8] sm:$0xff] %v2403
        %2660 = vst [vmem:[%s135 + $0x6d0] sm:$0xff] %v2404
        %2661 = vst [vmem:[%s135 + $0x6d8] sm:$0xff] %v2405
        %2662 = vst [vmem:[%s135 + $0x6e0] sm:$0xff] %v2406
        %2663 = vst [vmem:[%s135 + $0x6e8] sm:$0xff] %v2407
        %2664 = vst [vmem:[%s135 + $0x6f0] sm:$0xff] %v2408
        %2665 = vst [vmem:[%s135 + $0x6f8] sm:$0xff] %v2409
        %2666 = vst [vmem:[%s135 + $0x700] sm:$0xff] %v2410
        %2667 = vst [vmem:[%s135 + $0x708] sm:$0xff] %v2411
        %2668 = vst [vmem:[%s135 + $0x710] sm:$0xff] %v2412
        %2669 = vst [vmem:[%s135 + $0x718] sm:$0xff] %v2413
        %2670 = vst [vmem:[%s135 + $0x720] sm:$0xff] %v2414
        %2671 = vst [vmem:[%s135 + $0x728] sm:$0xff] %v2415
        %2672 = vst [vmem:[%s135 + $0x730] sm:$0xff] %v2416
        %2673 = vst [vmem:[%s135 + $0x738] sm:$0xff] %v2417
        %2674 = vst [vmem:[%s135 + $0x740] sm:$0xff] %v2418
        %2675 = vst [vmem:[%s135 + $0x748] sm:$0xff] %v2419
        %2676 = vst [vmem:[%s135 + $0x750] sm:$0xff] %v2420
        %2677 = vst [vmem:[%s135 + $0x758] sm:$0xff] %v2421
        %2678 = vst [vmem:[%s135 + $0x760] sm:$0xff] %v2422
        %2679 = vst [vmem:[%s135 + $0x768] sm:$0xff] %v2423
        %2680 = vst [vmem:[%s135 + $0x770] sm:$0xff] %v2424
        %2681 = vst [vmem:[%s135 + $0x778] sm:$0xff] %v2425
        %2682 = vst [vmem:[%s135 + $0x780] sm:$0xff] %v2426
        %2683 = vst [vmem:[%s135 + $0x788] sm:$0xff] %v2427
        %2684 = vst [vmem:[%s135 + $0x790] sm:$0xff] %v2428
        %2685 = vst [vmem:[%s135 + $0x798] sm:$0xff] %v2429
        %2686 = vst [vmem:[%s135 + $0x7a0] sm:$0xff] %v2430
        %2687 = vst [vmem:[%s135 + $0x7a8] sm:$0xff] %v2431
        %2688 = vst [vmem:[%s135 + $0x7b0] sm:$0xff] %v2432
        %2689 = vst [vmem:[%s135 + $0x7b8] sm:$0xff] %v2433
        %2690 = vst [vmem:[%s135 + $0x7c0] sm:$0xff] %v2434
        %2691 = vst [vmem:[%s135 + $0x7c8] sm:$0xff] %v2435
        %2692 = vst [vmem:[%s135 + $0x7d0] sm:$0xff] %v2436
        %2693 = vst [vmem:[%s135 + $0x7d8] sm:$0xff] %v2437
        %2694 = vst [vmem:[%s135 + $0x7e0] sm:$0xff] %v2438
        %2695 = vst [vmem:[%s135 + $0x7e8] sm:$0xff] %v2439
        %2696 = vst [vmem:[%s135 + $0x7f0] sm:$0xff] %v2440
        %2697 = vst [vmem:[%s135 + $0x7f8] sm:$0xff] %v2441
        %s2698 = sand.u32 %s52, 1
        %s2699 = scalar_lea.sflag [#allocation4], %s2698
        %s2700 = sand.u32 %s52, 1
        %s2701 = smul.addr %s2700, 2048
        %s2702 = scalar_lea.vmem [#allocation5], %s2701
        // Predicated region
        $region29: #{tpu_custom_call.1} parent=23 // pred_check
          %p2703 = pneg %p62
        $region30: #{tpu_custom_call.1} parent=23 // pred_check_branch
          %2705 = sbr.rel (%p2703) target = $region32
        $region31: #{tpu_custom_call.1} parent=23 // pred_region
          %s2706 = smul.u32 16, %s18
          %s2708 = ssub.s32 32768, 32768
          %2709 = vsyncadd %s2699, %s2708
          %s2710 = smul.addr %s2706, 16
          %s2711 = smul.addr %s2710, 128
          %s2712 = scalar_lea.hbm %s1, %s2711
          %s2713 = sshll.u32 %s2702, 4
          %s2714 = int_to_ptr.vmem [resolvable:$true] %s2713
          %2719 = dma.vmem_to_hbm [thread:$0]  %s2714, 32768, %s2712, %s2699, 2048, 2048, 128
        $region32: #{tpu_custom_call.1} parent=23 // pred_fallthru
          _
      $region24: #{tpu_custom_call.1} parent=5 // pred_fallthru
        _
      %p2720 = scmp.le.s32.totalorder 2, %s13
      // Predicated region
      $region33: #{tpu_custom_call.1} parent=5 // pred_check
        %p2721 = pneg %p2720
      $region34: #{tpu_custom_call.1} parent=5 // pred_check_branch
        %2723 = sbr.rel (%p2721) target = $region36
      $region35: #{tpu_custom_call.1} parent=5 // pred_region
        %s2724 = ssub.s32 %s13, 2
        // Predicated region
        $region37: #{tpu_custom_call.1} parent=35 // pred_check
          %p2725 = pneg %p68
        $region38: #{tpu_custom_call.1} parent=35 // pred_check_branch
          %2727 = sbr.rel (%p2725) target = $region40
        $region39: #{tpu_custom_call.1} parent=35 // pred_region
          %s2728 = sand.u32 %s53, 1
          %s2729 = scalar_lea.sflag [#allocation4], %s2728
          %s2730 = sand.u32 %s53, 1
          %s2731 = smul.addr %s2730, 2048
          %s2732 = scalar_lea.vmem [#allocation5], %s2731
          %2733 = dma.done %s2729, 32768
        $region40: #{tpu_custom_call.1} parent=35 // pred_fallthru
          _
      $region36: #{tpu_custom_call.1} parent=5 // pred_fallthru
        _
    $region6: #{tpu_custom_call.1} parent=1 // loop_footer
      %s17 = sadd.s32 1, %s13
    $region7: #{tpu_custom_call.1} parent=1 // loop_footer_branch
      %12 = sbr.rel target = $region3
    $region8: #{tpu_custom_call.1} parent=1 // loop_exit
      _
    %2734 = vsyncpa [#allocation3], 1
    %s2735 = scalar_lea.sflag [#allocation3], 1
    %2736 = vsyncpa %s2735, 1
    %2737 = vsyncpa [#allocation4], 1
    %s2738 = scalar_lea.sflag [#allocation4], 1
    %2739 = vsyncpa %s2738, 1

</llo_original>
